<compile_context>
chip_gen: v6e
topology: v6e:2x2x1
jax: 0.10.0
libtpu: 0.0.40
codegen_flags: <defaults>
</compile_context>

<pallas_src>
import functools

import jax
import jax.numpy as jnp
from jax.experimental import pallas as pl
from jax.experimental.pallas import tpu as pltpu


# ----------------------------------------------------------------------------
# Fused kernel: projections + multi-head attention + output projection,
# one batch element per grid step.
# ----------------------------------------------------------------------------
def _fused_attention_kernel(q_ref, k_ref, v_ref,
                            wq_ref, bq_ref, wk_ref, bk_ref,
                            wv_ref, bv_ref, wo_ref, bo_ref,
                            o_ref, *, num_heads, mxu_dtype):
    # q_ref: (Lq, Dq)   k_ref: (Lkv, Dk)   v_ref: (Lkv, Dv)
    # w*_ref: (Din, Dout) pre-transposed   b*_ref: (1, Dout)
    # o_ref: (Lq, out_dim)

    def mm(x, w):
        if mxu_dtype is not None:
            x = x.astype(mxu_dtype)
            w = w.astype(mxu_dtype)
        return jnp.dot(x, w, preferred_element_type=jnp.float32)

    # Projections (1/sqrt(Cqk) already folded into wq/bq). f32 accumulation.
    qp = mm(q_ref[...], wq_ref[...]) + bq_ref[...]      # (Lq, QK)
    kp = mm(k_ref[...], wk_ref[...]) + bk_ref[...]      # (Lkv, QK)
    vp = mm(v_ref[...], wv_ref[...]) + bv_ref[...]      # (Lkv, V)

    H = num_heads
    Cqk = qp.shape[-1] // H
    Cv = vp.shape[-1] // H

    head_outs = []
    for h in range(H):                                  # static unroll over heads
        qh = qp[:, h * Cqk:(h + 1) * Cqk]
        kh = kp[:, h * Cqk:(h + 1) * Cqk]
        vh = vp[:, h * Cv:(h + 1) * Cv]
        if mxu_dtype is not None:
            qh = qh.astype(mxu_dtype)
            kh = kh.astype(mxu_dtype)
        # scores = q @ k^T without an explicit transpose: contract last dims.
        s = jax.lax.dot_general(qh, kh, (((1,), (1,)), ((), ())),
                                preferred_element_type=jnp.float32)  # (Lq, Lkv)
        # numerically-stable softmax over keys, in f32
        s = s - jnp.max(s, axis=-1, keepdims=True)
        p = jnp.exp(s)
        p = p * pl.reciprocal(jnp.sum(p, axis=-1, keepdims=True), approx=True)
        if mxu_dtype is not None:
            p = p.astype(mxu_dtype)
            vh = vh.astype(mxu_dtype)
        head_outs.append(jnp.dot(p, vh, preferred_element_type=jnp.float32))

    mix = jnp.concatenate(head_outs, axis=-1)           # (Lq, H*Cv) lane-dense
    out = mm(mix, wo_ref[...]) + bo_ref[...]            # (Lq, out_dim)
    o_ref[...] = out.astype(o_ref.dtype)


def fused_attention_pallas(q, k, v, wq, bq, wk, bk, wv, bv, wo, bo,
                           num_heads, mxu_dtype=None):
    N, Lq, Dq = q.shape
    _, Lkv, Dk = k.shape
    Dv = v.shape[2]
    QK = wq.shape[1]
    V = wv.shape[1]
    OUT = wo.shape[1]

    kernel = functools.partial(_fused_attention_kernel,
                               num_heads=num_heads, mxu_dtype=mxu_dtype)

    # Advisory cost hint for the XLA scheduler.
    flops = 2 * N * (Lq * Dq * QK + Lkv * Dk * QK + Lkv * Dv * V
                     + Lq * Lkv * QK + Lq * Lkv * V + Lq * V * OUT)
    bytes_accessed = 4 * (q.size + k.size + v.size + N * Lq * OUT
                          + wq.size + wk.size + wv.size + wo.size
                          + bq.size + bk.size + bv.size + bo.size)
    cost = pl.CostEstimate(flops=int(flops),
                           transcendentals=int(N * num_heads * Lq * Lkv),
                           bytes_accessed=int(bytes_accessed))

    def batch_spec(L, D):
        # per-batch activation block; last two dims are the full (L, D) tile
        return pl.BlockSpec((pl.Squeezed(), L, D), lambda n: (n, 0, 0))

    def resident(arr):
        # full block, constant index_map -> stays resident in VMEM across the grid
        return pl.BlockSpec(arr.shape, lambda n: (0, 0))

    return pl.pallas_call(
        kernel,
        out_shape=jax.ShapeDtypeStruct((N, Lq, OUT), q.dtype),
        grid=(N,),
        in_specs=[
            batch_spec(Lq, Dq),            # q
            batch_spec(Lkv, Dk),           # k
            batch_spec(Lkv, Dv),           # v
            resident(wq), resident(bq),
            resident(wk), resident(bk),
            resident(wv), resident(bv),
            resident(wo), resident(bo),
        ],
        out_specs=pl.BlockSpec((pl.Squeezed(), Lq, OUT), lambda n: (n, 0, 0)),
        compiler_params=pltpu.CompilerParams(
            dimension_semantics=("parallel",)),
        cost_estimate=cost,
    )(q, k, v, wq, bq, wk, bk, wv, bv, wo, bo)


# ----------------------------------------------------------------------------
# Module wrapper (parameter init in plain JAX)
# ----------------------------------------------------------------------------
def _xavier_uniform(key, in_dim, out_dim, dtype=jnp.float32):
    # stored pre-transposed: (Din, Dout)
    bound = (6.0 / (in_dim + out_dim)) ** 0.5
    return jax.random.uniform(key, (in_dim, out_dim), dtype, -bound, bound)


class AttentionPallas:
    def __init__(self, q_in_dim, k_in_dim, v_in_dim, qk_proj_dim, v_proj_dim,
                 num_heads, out_dim, key):
        assert qk_proj_dim % num_heads == 0 and v_proj_dim % num_heads == 0
        self.num_heads = num_heads
        self.qk_proj_dim = qk_proj_dim
        self.v_proj_dim = v_proj_dim
        self.out_dim = out_dim

        kq, kk, kv, ko = jax.random.split(key, 4)
        # canonical (unscaled) parameters, pre-transposed to (Din, Dout)
        self.Wq = _xavier_uniform(kq, q_in_dim, qk_proj_dim)
        self.Wk = _xavier_uniform(kk, k_in_dim, qk_proj_dim)
        self.Wv = _xavier_uniform(kv, v_in_dim, v_proj_dim)
        self.Wo = _xavier_uniform(ko, v_proj_dim, out_dim)
        self.bq = jnp.zeros((1, qk_proj_dim), jnp.float32)
        self.bk = jnp.zeros((1, qk_proj_dim), jnp.float32)
        self.bv = jnp.zeros((1, v_proj_dim), jnp.float32)
        self.bo = jnp.zeros((1, out_dim), jnp.float32)

        # fold the 1/sqrt(Cqk) attention scale into the q projection (free at init)
        scale = (qk_proj_dim // num_heads) ** -0.5
        self._Wq_scaled = self.Wq * scale
        self._bq_scaled = self.bq * scale

    def __call__(self, q, k, v, mxu_dtype=None):
        assert q.ndim == 3 and k.ndim == 3 and v.ndim == 3
        N = q.shape[0]
        assert k.shape[0] == N and v.shape[0] == N
        assert v.shape[1] == k.shape[1]
        return fused_attention_pallas(
            q, k, v,
            self._Wq_scaled, self._bq_scaled,
            self.Wk, self.bk,
            self.Wv, self.bv,
            self.Wo, self.bo,
            num_heads=self.num_heads,
            mxu_dtype=mxu_dtype)


# ----------------------------------------------------------------------------
# Pure-JAX reference (mirrors the PyTorch forward) for correctness check
# ----------------------------------------------------------------------------
def _reference(mod, q, k, v):
    N, Lq, _ = q.shape
    Lkv = k.shape[1]
    H = mod.num_heads
    Cqk = mod.qk_proj_dim // H
    Cv = mod.v_proj_dim // H
    qp = q @ mod.Wq + mod.bq          # weights stored as (Din, Dout)
    kp = k @ mod.Wk + mod.bk
    vp = v @ mod.Wv + mod.bv
    qh = qp.reshape(N, Lq, H, Cqk)
    kh = kp.reshape(N, Lkv, H, Cqk)
    vh = vp.reshape(N, Lkv, H, Cv)
    aff = jnp.einsum('nqhc,nkhc->nqkh', qh / (Cqk ** 0.5), kh)
    aff = jax.nn.softmax(aff, axis=-2)
    mix = jnp.einsum('nqlh,nlhc->nqhc', aff, vh)
    return mix.reshape(N, Lq, H * Cv) @ mod.Wo + mod.bo


if __name__ == "__main__":
    key = jax.random.PRNGKey(0)
    kparam, kq, kk, kv = jax.random.split(key, 4)

    # Small shapes consistent with the module's forward contract.
    N, Lq, Lkv = 2, 8, 8
    q_in_dim = k_in_dim = v_in_dim = 32
    qk_proj_dim = 32
    v_proj_dim = 32
    num_heads = 4
    out_dim = 32

    mod = AttentionPallas(q_in_dim, k_in_dim, v_in_dim, qk_proj_dim,
                          v_proj_dim, num_heads, out_dim, kparam)

    q = jax.random.normal(kq, (N, Lq, q_in_dim), jnp.float32)
    k = jax.random.normal(kk, (N, Lkv, k_in_dim), jnp.float32)
    v = jax.random.normal(kv, (N, Lkv, v_in_dim), jnp.float32)

    ref = _reference(mod, q, k, v)

    # f32 path (tolerance relaxed slightly for pl.reciprocal(approx=True))
    out = jax.block_until_ready(mod(q, k, v))
    assert out.shape == (N, Lq, out_dim)
    assert jnp.allclose(out, ref, atol=5e-3, rtol=5e-3), (
        f"f32 mismatch vs reference, max abs diff {jnp.max(jnp.abs(out - ref))}")

    # bf16 MXU-operand path (v6e / v7x recommendation), f32 accumulation & softmax
    out_bf16 = jax.block_until_ready(mod(q, k, v, mxu_dtype=jnp.bfloat16))
    assert out_bf16.shape == (N, Lq, out_dim)
    assert jnp.allclose(out_bf16, ref, atol=1e-1, rtol=1e-1), (
        f"bf16 mismatch vs reference, max abs diff {jnp.max(jnp.abs(out_bf16 - ref))}")

    print("KERNEL_OK")
</pallas_src>

<mosaic_0001>
module attributes {stable_mosaic.version = 11 : i64} {
  func.func @_fused_attention_kernel(%arg0: i32, %arg1: memref<1x8x32xf32, #tpu.memory_space<vmem>>, %arg2: memref<1x8x32xf32, #tpu.memory_space<vmem>>, %arg3: memref<1x8x32xf32, #tpu.memory_space<vmem>>, %arg4: memref<32x32xf32, #tpu.memory_space<vmem>>, %arg5: memref<1x32xf32, #tpu.memory_space<vmem>>, %arg6: memref<32x32xf32, #tpu.memory_space<vmem>>, %arg7: memref<1x32xf32, #tpu.memory_space<vmem>>, %arg8: memref<32x32xf32, #tpu.memory_space<vmem>>, %arg9: memref<1x32xf32, #tpu.memory_space<vmem>>, %arg10: memref<32x32xf32, #tpu.memory_space<vmem>>, %arg11: memref<1x32xf32, #tpu.memory_space<vmem>>, %arg12: memref<1x8x32xf32, #tpu.memory_space<vmem>>) attributes {dimension_semantics = [#tpu.dimension_semantics<parallel>], iteration_bounds = array<i64: 2>, scalar_prefetch = 0 : i64, scratch_operands = 0 : i64, tpu.core_type = #tpu.core_type<tc>, window_params = [{transform_indices = @transform_0, window_bounds = array<i64: 1, 8, 32>}, {transform_indices = @transform_1, window_bounds = array<i64: 1, 8, 32>}, {transform_indices = @transform_2, window_bounds = array<i64: 1, 8, 32>}, {pipeline_mode = #tpu.pipeline_mode<synchronous>, transform_indices = @transform_3, window_bounds = array<i64: 32, 32>}, {pipeline_mode = #tpu.pipeline_mode<synchronous>, transform_indices = @transform_4, window_bounds = array<i64: 1, 32>}, {pipeline_mode = #tpu.pipeline_mode<synchronous>, transform_indices = @transform_5, window_bounds = array<i64: 32, 32>}, {pipeline_mode = #tpu.pipeline_mode<synchronous>, transform_indices = @transform_6, window_bounds = array<i64: 1, 32>}, {pipeline_mode = #tpu.pipeline_mode<synchronous>, transform_indices = @transform_7, window_bounds = array<i64: 32, 32>}, {pipeline_mode = #tpu.pipeline_mode<synchronous>, transform_indices = @transform_8, window_bounds = array<i64: 1, 32>}, {pipeline_mode = #tpu.pipeline_mode<synchronous>, transform_indices = @transform_9, window_bounds = array<i64: 32, 32>}, {pipeline_mode = #tpu.pipeline_mode<synchronous>, transform_indices = @transform_10, window_bounds = array<i64: 1, 32>}, {transform_indices = @transform_11, window_bounds = array<i64: 1, 8, 32>}]} {
    %c0 = arith.constant 0 : index
    %c0_0 = arith.constant 0 : index
    %c0_1 = arith.constant 0 : index
    %0 = vector.load %arg1[%c0, %c0_0, %c0_1] : memref<1x8x32xf32, #tpu.memory_space<vmem>>, vector<1x8x32xf32>
    %1 = vector.shape_cast %0 : vector<1x8x32xf32> to vector<8x32xf32>
    %c0_2 = arith.constant 0 : index
    %c0_3 = arith.constant 0 : index
    %2 = vector.load %arg4[%c0_2, %c0_3] : memref<32x32xf32, #tpu.memory_space<vmem>>, vector<32x32xf32>
    %cst = arith.constant dense<0.000000e+00> : vector<8x32xf32>
    %3 = tpu.matmul %1, %2, %cst {dimension_numbers = #tpu.dot_dimension_numbers<[1], [0], [0], [1], [0, 0, 1, 1], [], []>} : vector<8x32xf32>, vector<32x32xf32>, vector<8x32xf32> -> vector<8x32xf32>
    %c0_4 = arith.constant 0 : index
    %c0_5 = arith.constant 0 : index
    %4 = vector.load %arg5[%c0_4, %c0_5] : memref<1x32xf32, #tpu.memory_space<vmem>>, vector<1x32xf32>
    %5 = vector.broadcast %4 : vector<1x32xf32> to vector<8x32xf32>
    %6 = arith.addf %3, %5 : vector<8x32xf32>
    %c0_6 = arith.constant 0 : index
    %c0_7 = arith.constant 0 : index
    %c0_8 = arith.constant 0 : index
    %7 = vector.load %arg2[%c0_6, %c0_7, %c0_8] : memref<1x8x32xf32, #tpu.memory_space<vmem>>, vector<1x8x32xf32>
    %8 = vector.shape_cast %7 : vector<1x8x32xf32> to vector<8x32xf32>
    %c0_9 = arith.constant 0 : index
    %c0_10 = arith.constant 0 : index
    %9 = vector.load %arg6[%c0_9, %c0_10] : memref<32x32xf32, #tpu.memory_space<vmem>>, vector<32x32xf32>
    %cst_11 = arith.constant dense<0.000000e+00> : vector<8x32xf32>
    %10 = tpu.matmul %8, %9, %cst_11 {dimension_numbers = #tpu.dot_dimension_numbers<[1], [0], [0], [1], [0, 0, 1, 1], [], []>} : vector<8x32xf32>, vector<32x32xf32>, vector<8x32xf32> -> vector<8x32xf32>
    %c0_12 = arith.constant 0 : index
    %c0_13 = arith.constant 0 : index
    %11 = vector.load %arg7[%c0_12, %c0_13] : memref<1x32xf32, #tpu.memory_space<vmem>>, vector<1x32xf32>
    %12 = vector.broadcast %11 : vector<1x32xf32> to vector<8x32xf32>
    %13 = arith.addf %10, %12 : vector<8x32xf32>
    %c0_14 = arith.constant 0 : index
    %c0_15 = arith.constant 0 : index
    %c0_16 = arith.constant 0 : index
    %14 = vector.load %arg3[%c0_14, %c0_15, %c0_16] : memref<1x8x32xf32, #tpu.memory_space<vmem>>, vector<1x8x32xf32>
    %15 = vector.shape_cast %14 : vector<1x8x32xf32> to vector<8x32xf32>
    %c0_17 = arith.constant 0 : index
    %c0_18 = arith.constant 0 : index
    %16 = vector.load %arg8[%c0_17, %c0_18] : memref<32x32xf32, #tpu.memory_space<vmem>>, vector<32x32xf32>
    %cst_19 = arith.constant dense<0.000000e+00> : vector<8x32xf32>
    %17 = tpu.matmul %15, %16, %cst_19 {dimension_numbers = #tpu.dot_dimension_numbers<[1], [0], [0], [1], [0, 0, 1, 1], [], []>} : vector<8x32xf32>, vector<32x32xf32>, vector<8x32xf32> -> vector<8x32xf32>
    %c0_20 = arith.constant 0 : index
    %c0_21 = arith.constant 0 : index
    %18 = vector.load %arg9[%c0_20, %c0_21] : memref<1x32xf32, #tpu.memory_space<vmem>>, vector<1x32xf32>
    %19 = vector.broadcast %18 : vector<1x32xf32> to vector<8x32xf32>
    %20 = arith.addf %17, %19 : vector<8x32xf32>
    %21 = vector.extract_strided_slice %6 {offsets = [0, 0], sizes = [8, 8], strides = [1, 1]} : vector<8x32xf32> to vector<8x8xf32>
    %22 = vector.extract_strided_slice %13 {offsets = [0, 0], sizes = [8, 8], strides = [1, 1]} : vector<8x32xf32> to vector<8x8xf32>
    %23 = vector.extract_strided_slice %20 {offsets = [0, 0], sizes = [8, 8], strides = [1, 1]} : vector<8x32xf32> to vector<8x8xf32>
    %cst_22 = arith.constant dense<0.000000e+00> : vector<8x8xf32>
    %24 = tpu.matmul %21, %22, %cst_22 {dimension_numbers = #tpu.dot_dimension_numbers<[1], [1], [0], [0], [0, 0, 1, 0], [], []>} : vector<8x8xf32>, vector<8x8xf32>, vector<8x8xf32> -> vector<8x8xf32>
    %cst_23 = arith.constant dense<0xFF800000> : vector<8xf32>
    %25 = vector.multi_reduction <maximumf>, %24, %cst_23 [1] : vector<8x8xf32> to vector<8xf32>
    %26 = vector.shape_cast %25 : vector<8xf32> to vector<8x1xf32>
    %27 = vector.broadcast %26 : vector<8x1xf32> to vector<8x8xf32>
    %28 = arith.subf %24, %27 : vector<8x8xf32>
    %29 = math.exp %28 : vector<8x8xf32>
    %cst_24 = arith.constant dense<0.000000e+00> : vector<8xf32>
    %30 = vector.multi_reduction <add>, %29, %cst_24 [1] : vector<8x8xf32> to vector<8xf32>
    %31 = vector.shape_cast %30 : vector<8xf32> to vector<8x1xf32>
    %32 = tpu.reciprocal %31 {approx = true} : vector<8x1xf32> -> vector<8x1xf32>
    %33 = vector.broadcast %32 : vector<8x1xf32> to vector<8x8xf32>
    %34 = arith.mulf %29, %33 : vector<8x8xf32>
    %cst_25 = arith.constant dense<0.000000e+00> : vector<8x8xf32>
    %35 = tpu.matmul %34, %23, %cst_25 {dimension_numbers = #tpu.dot_dimension_numbers<[1], [0], [0], [1], [0, 0, 1, 1], [], []>} : vector<8x8xf32>, vector<8x8xf32>, vector<8x8xf32> -> vector<8x8xf32>
    %36 = vector.extract_strided_slice %6 {offsets = [0, 8], sizes = [8, 8], strides = [1, 1]} : vector<8x32xf32> to vector<8x8xf32>
    %37 = vector.extract_strided_slice %13 {offsets = [0, 8], sizes = [8, 8], strides = [1, 1]} : vector<8x32xf32> to vector<8x8xf32>
    %38 = vector.extract_strided_slice %20 {offsets = [0, 8], sizes = [8, 8], strides = [1, 1]} : vector<8x32xf32> to vector<8x8xf32>
    %cst_26 = arith.constant dense<0.000000e+00> : vector<8x8xf32>
    %39 = tpu.matmul %36, %37, %cst_26 {dimension_numbers = #tpu.dot_dimension_numbers<[1], [1], [0], [0], [0, 0, 1, 0], [], []>} : vector<8x8xf32>, vector<8x8xf32>, vector<8x8xf32> -> vector<8x8xf32>
    %cst_27 = arith.constant dense<0xFF800000> : vector<8xf32>
    %40 = vector.multi_reduction <maximumf>, %39, %cst_27 [1] : vector<8x8xf32> to vector<8xf32>
    %41 = vector.shape_cast %40 : vector<8xf32> to vector<8x1xf32>
    %42 = vector.broadcast %41 : vector<8x1xf32> to vector<8x8xf32>
    %43 = arith.subf %39, %42 : vector<8x8xf32>
    %44 = math.exp %43 : vector<8x8xf32>
    %cst_28 = arith.constant dense<0.000000e+00> : vector<8xf32>
    %45 = vector.multi_reduction <add>, %44, %cst_28 [1] : vector<8x8xf32> to vector<8xf32>
    %46 = vector.shape_cast %45 : vector<8xf32> to vector<8x1xf32>
    %47 = tpu.reciprocal %46 {approx = true} : vector<8x1xf32> -> vector<8x1xf32>
    %48 = vector.broadcast %47 : vector<8x1xf32> to vector<8x8xf32>
    %49 = arith.mulf %44, %48 : vector<8x8xf32>
    %cst_29 = arith.constant dense<0.000000e+00> : vector<8x8xf32>
    %50 = tpu.matmul %49, %38, %cst_29 {dimension_numbers = #tpu.dot_dimension_numbers<[1], [0], [0], [1], [0, 0, 1, 1], [], []>} : vector<8x8xf32>, vector<8x8xf32>, vector<8x8xf32> -> vector<8x8xf32>
    %51 = vector.extract_strided_slice %6 {offsets = [0, 16], sizes = [8, 8], strides = [1, 1]} : vector<8x32xf32> to vector<8x8xf32>
    %52 = vector.extract_strided_slice %13 {offsets = [0, 16], sizes = [8, 8], strides = [1, 1]} : vector<8x32xf32> to vector<8x8xf32>
    %53 = vector.extract_strided_slice %20 {offsets = [0, 16], sizes = [8, 8], strides = [1, 1]} : vector<8x32xf32> to vector<8x8xf32>
    %cst_30 = arith.constant dense<0.000000e+00> : vector<8x8xf32>
    %54 = tpu.matmul %51, %52, %cst_30 {dimension_numbers = #tpu.dot_dimension_numbers<[1], [1], [0], [0], [0, 0, 1, 0], [], []>} : vector<8x8xf32>, vector<8x8xf32>, vector<8x8xf32> -> vector<8x8xf32>
    %cst_31 = arith.constant dense<0xFF800000> : vector<8xf32>
    %55 = vector.multi_reduction <maximumf>, %54, %cst_31 [1] : vector<8x8xf32> to vector<8xf32>
    %56 = vector.shape_cast %55 : vector<8xf32> to vector<8x1xf32>
    %57 = vector.broadcast %56 : vector<8x1xf32> to vector<8x8xf32>
    %58 = arith.subf %54, %57 : vector<8x8xf32>
    %59 = math.exp %58 : vector<8x8xf32>
    %cst_32 = arith.constant dense<0.000000e+00> : vector<8xf32>
    %60 = vector.multi_reduction <add>, %59, %cst_32 [1] : vector<8x8xf32> to vector<8xf32>
    %61 = vector.shape_cast %60 : vector<8xf32> to vector<8x1xf32>
    %62 = tpu.reciprocal %61 {approx = true} : vector<8x1xf32> -> vector<8x1xf32>
    %63 = vector.broadcast %62 : vector<8x1xf32> to vector<8x8xf32>
    %64 = arith.mulf %59, %63 : vector<8x8xf32>
    %cst_33 = arith.constant dense<0.000000e+00> : vector<8x8xf32>
    %65 = tpu.matmul %64, %53, %cst_33 {dimension_numbers = #tpu.dot_dimension_numbers<[1], [0], [0], [1], [0, 0, 1, 1], [], []>} : vector<8x8xf32>, vector<8x8xf32>, vector<8x8xf32> -> vector<8x8xf32>
    %66 = vector.extract_strided_slice %6 {offsets = [0, 24], sizes = [8, 8], strides = [1, 1]} : vector<8x32xf32> to vector<8x8xf32>
    %67 = vector.extract_strided_slice %13 {offsets = [0, 24], sizes = [8, 8], strides = [1, 1]} : vector<8x32xf32> to vector<8x8xf32>
    %68 = vector.extract_strided_slice %20 {offsets = [0, 24], sizes = [8, 8], strides = [1, 1]} : vector<8x32xf32> to vector<8x8xf32>
    %cst_34 = arith.constant dense<0.000000e+00> : vector<8x8xf32>
    %69 = tpu.matmul %66, %67, %cst_34 {dimension_numbers = #tpu.dot_dimension_numbers<[1], [1], [0], [0], [0, 0, 1, 0], [], []>} : vector<8x8xf32>, vector<8x8xf32>, vector<8x8xf32> -> vector<8x8xf32>
    %cst_35 = arith.constant dense<0xFF800000> : vector<8xf32>
    %70 = vector.multi_reduction <maximumf>, %69, %cst_35 [1] : vector<8x8xf32> to vector<8xf32>
    %71 = vector.shape_cast %70 : vector<8xf32> to vector<8x1xf32>
    %72 = vector.broadcast %71 : vector<8x1xf32> to vector<8x8xf32>
    %73 = arith.subf %69, %72 : vector<8x8xf32>
    %74 = math.exp %73 : vector<8x8xf32>
    %cst_36 = arith.constant dense<0.000000e+00> : vector<8xf32>
    %75 = vector.multi_reduction <add>, %74, %cst_36 [1] : vector<8x8xf32> to vector<8xf32>
    %76 = vector.shape_cast %75 : vector<8xf32> to vector<8x1xf32>
    %77 = tpu.reciprocal %76 {approx = true} : vector<8x1xf32> -> vector<8x1xf32>
    %78 = vector.broadcast %77 : vector<8x1xf32> to vector<8x8xf32>
    %79 = arith.mulf %74, %78 : vector<8x8xf32>
    %cst_37 = arith.constant dense<0.000000e+00> : vector<8x8xf32>
    %80 = tpu.matmul %79, %68, %cst_37 {dimension_numbers = #tpu.dot_dimension_numbers<[1], [0], [0], [1], [0, 0, 1, 1], [], []>} : vector<8x8xf32>, vector<8x8xf32>, vector<8x8xf32> -> vector<8x8xf32>
    %81 = tpu.concatenate %35, %50, %65, %80 in 1 : vector<8x8xf32>, vector<8x8xf32>, vector<8x8xf32>, vector<8x8xf32> -> vector<8x32xf32>
    %c0_38 = arith.constant 0 : index
    %c0_39 = arith.constant 0 : index
    %82 = vector.load %arg10[%c0_38, %c0_39] : memref<32x32xf32, #tpu.memory_space<vmem>>, vector<32x32xf32>
    %cst_40 = arith.constant dense<0.000000e+00> : vector<8x32xf32>
    %83 = tpu.matmul %81, %82, %cst_40 {dimension_numbers = #tpu.dot_dimension_numbers<[1], [0], [0], [1], [0, 0, 1, 1], [], []>} : vector<8x32xf32>, vector<32x32xf32>, vector<8x32xf32> -> vector<8x32xf32>
    %c0_41 = arith.constant 0 : index
    %c0_42 = arith.constant 0 : index
    %84 = vector.load %arg11[%c0_41, %c0_42] : memref<1x32xf32, #tpu.memory_space<vmem>>, vector<1x32xf32>
    %85 = vector.broadcast %84 : vector<1x32xf32> to vector<8x32xf32>
    %86 = arith.addf %83, %85 : vector<8x32xf32>
    %c0_43 = arith.constant 0 : index
    %c0_44 = arith.constant 0 : index
    %c0_45 = arith.constant 0 : index
    %87 = vector.load %arg12[%c0_43, %c0_44, %c0_45] : memref<1x8x32xf32, #tpu.memory_space<vmem>>, vector<1x8x32xf32>
    %88 = vector.shape_cast %87 : vector<1x8x32xf32> to vector<8x32xf32>
    %89 = vector.shape_cast %86 : vector<8x32xf32> to vector<1x8x32xf32>
    tpu.vector_store %arg12[%c0_43, %c0_44, %c0_45], %89 {strides = array<i32>} : memref<1x8x32xf32, #tpu.memory_space<vmem>>, vector<1x8x32xf32>,
    return
  }
  func.func @transform_0(%arg0: i32) -> (i32, i32, i32) {
    %c0_i32 = arith.constant 0 : i32
    %c0_i32_0 = arith.constant 0 : i32
    %c0_i32_1 = arith.constant 0 : i32
    return %arg0, %c0_i32, %c0_i32_0 : i32, i32, i32
  }
  func.func @transform_1(%arg0: i32) -> (i32, i32, i32) {
    %c0_i32 = arith.constant 0 : i32
    %c0_i32_0 = arith.constant 0 : i32
    %c0_i32_1 = arith.constant 0 : i32
    return %arg0, %c0_i32, %c0_i32_0 : i32, i32, i32
  }
  func.func @transform_2(%arg0: i32) -> (i32, i32, i32) {
    %c0_i32 = arith.constant 0 : i32
    %c0_i32_0 = arith.constant 0 : i32
    %c0_i32_1 = arith.constant 0 : i32
    return %arg0, %c0_i32, %c0_i32_0 : i32, i32, i32
  }
  func.func @transform_3(%arg0: i32) -> (i32, i32) {
    %c0_i32 = arith.constant 0 : i32
    %c0_i32_0 = arith.constant 0 : i32
    %c0_i32_1 = arith.constant 0 : i32
    return %c0_i32, %c0_i32_0 : i32, i32
  }
  func.func @transform_4(%arg0: i32) -> (i32, i32) {
    %c0_i32 = arith.constant 0 : i32
    %c0_i32_0 = arith.constant 0 : i32
    %c0_i32_1 = arith.constant 0 : i32
    return %c0_i32, %c0_i32_0 : i32, i32
  }
  func.func @transform_5(%arg0: i32) -> (i32, i32) {
    %c0_i32 = arith.constant 0 : i32
    %c0_i32_0 = arith.constant 0 : i32
    %c0_i32_1 = arith.constant 0 : i32
    return %c0_i32, %c0_i32_0 : i32, i32
  }
  func.func @transform_6(%arg0: i32) -> (i32, i32) {
    %c0_i32 = arith.constant 0 : i32
    %c0_i32_0 = arith.constant 0 : i32
    %c0_i32_1 = arith.constant 0 : i32
    return %c0_i32, %c0_i32_0 : i32, i32
  }
  func.func @transform_7(%arg0: i32) -> (i32, i32) {
    %c0_i32 = arith.constant 0 : i32
    %c0_i32_0 = arith.constant 0 : i32
    %c0_i32_1 = arith.constant 0 : i32
    return %c0_i32, %c0_i32_0 : i32, i32
  }
  func.func @transform_8(%arg0: i32) -> (i32, i32) {
    %c0_i32 = arith.constant 0 : i32
    %c0_i32_0 = arith.constant 0 : i32
    %c0_i32_1 = arith.constant 0 : i32
    return %c0_i32, %c0_i32_0 : i32, i32
  }
  func.func @transform_9(%arg0: i32) -> (i32, i32) {
    %c0_i32 = arith.constant 0 : i32
    %c0_i32_0 = arith.constant 0 : i32
    %c0_i32_1 = arith.constant 0 : i32
    return %c0_i32, %c0_i32_0 : i32, i32
  }
  func.func @transform_10(%arg0: i32) -> (i32, i32) {
    %c0_i32 = arith.constant 0 : i32
    %c0_i32_0 = arith.constant 0 : i32
    %c0_i32_1 = arith.constant 0 : i32
    return %c0_i32, %c0_i32_0 : i32, i32
  }
  func.func @transform_11(%arg0: i32) -> (i32, i32, i32) {
    %c0_i32 = arith.constant 0 : i32
    %c0_i32_0 = arith.constant 0 : i32
    %c0_i32_1 = arith.constant 0 : i32
    return %arg0, %c0_i32, %c0_i32_0 : i32, i32, i32
  }
}

</mosaic_0001>

<llo_original>
// kernel: tpu_custom_call.1
$region0: #{tpu_custom_call.1}
  #allocation0 [shape = 'u32[]', space=smem, size = 0x4, offset = 0x4, fixed_abs, tag = 'smem constant byte address 0x4 - core index']
  #allocation1 [shape = 'u32[144,128]{1,0:T(1,128)}', space=vmem, size = 0x12000, scoped, tag = 'internal scratch']
  %s0 = inlined_call_operand.hbm [shape: f32[2,8,32], index: 0, kind: input, shape index: {}]
  %s1 = inlined_call_operand.hbm [shape: f32[2,8,32], index: 1, kind: input, shape index: {}]
  %s2 = inlined_call_operand.hbm [shape: f32[2,8,32], index: 2, kind: input, shape index: {}]
  %s3 = inlined_call_operand.hbm [shape: f32[32,32], index: 3, kind: input, shape index: {}]
  %s4 = inlined_call_operand.vmem [shape: f32[1,32], index: 4, kind: input, shape index: {}]
  %s5 = inlined_call_operand.hbm [shape: f32[32,32], index: 5, kind: input, shape index: {}]
  %s6 = inlined_call_operand.vmem [shape: f32[1,32], index: 6, kind: input, shape index: {}]
  %s7 = inlined_call_operand.hbm [shape: f32[32,32], index: 7, kind: input, shape index: {}]
  %s8 = inlined_call_operand.vmem [shape: f32[1,32], index: 8, kind: input, shape index: {}]
  %s9 = inlined_call_operand.hbm [shape: f32[32,32], index: 9, kind: input, shape index: {}]
  %s10 = inlined_call_operand.vmem [shape: f32[1,32], index: 10, kind: input, shape index: {}]
  %s11 = inlined_call_operand.hbm [shape: f32[2,8,32], index: 11, kind: output, shape index: {}]
  %s12 = sld [smem:[#allocation0]]
  $region105: #{tpu_custom_call.1} parent=0
    _
  %s14 = ssub.s32 1, %s12
  %s15 = scalar_select 0, %s14, %s12
  $region1: #{tpu_custom_call.1} parent=0
    #allocation2 [shape = 'u8[8192]{0}', space=vmem, size = 0x2000, scoped, tag = 'input window, operand 0']
    #allocation3 [shape = 's32[2]{0}', space=sflag, size = 0x8, scoped, tag = 'scoped memory for tpu_custom_call.1']
    #allocation4 [shape = 's32[2]{0}', space=sflag, size = 0x8, scoped, tag = 'scoped memory for tpu_custom_call.1']
    #allocation5 [shape = 'u8[8192]{0}', space=vmem, size = 0x2000, scoped, tag = 'input window, operand 1']
    #allocation6 [shape = 's32[2]{0}', space=sflag, size = 0x8, scoped, tag = 'scoped memory for tpu_custom_call.1']
    #allocation7 [shape = 'u8[8192]{0}', space=vmem, size = 0x2000, scoped, tag = 'input window, operand 2']
    #allocation8 [shape = 'u8[16384]{0}', space=vmem, size = 0x4000, scoped, tag = 'input window, operand 3, single buffered']
    #allocation9 [shape = 's32[1]{0}', space=sflag, size = 0x4, scoped, tag = 'scoped memory for tpu_custom_call.1']
    #allocation10 [shape = 'u8[16384]{0}', space=vmem, size = 0x4000, scoped, tag = 'input window, operand 5, single buffered']
    #allocation11 [shape = 'u8[16384]{0}', space=vmem, size = 0x4000, scoped, tag = 'input window, operand 7, single buffered']
    #allocation12 [shape = 's32[1]{0}', space=sflag, size = 0x4, scoped, tag = 'scoped memory for tpu_custom_call.1']
    #allocation13 [shape = 'u8[16384]{0}', space=vmem, size = 0x4000, scoped, tag = 'input window, operand 9, single buffered']
    #allocation14 [shape = 'u8[8192]{0}', space=vmem, size = 0x2000, scoped, tag = 'output window, operand 0']
    %16 = vsyncpa [#allocation3], 0
    %s17 = scalar_lea.sflag [#allocation3], 1
    %18 = vsyncpa %s17, 0
    %19 = vsyncpa [#allocation6], 0
    %s20 = scalar_lea.sflag [#allocation6], 1
    %21 = vsyncpa %s20, 0
    %22 = vsyncpa [#allocation9], 0
    %23 = vsyncpa [#allocation12], 0
    %24 = vsyncpa [#allocation4], 0
    %s25 = scalar_lea.sflag [#allocation4], 1
    %26 = vsyncpa %s25, 0
    loop: start=0, step=1, limit=4
    $region2: #{tpu_custom_call.1} parent=1 // loop_pre_header
      _
    $region3: #{tpu_custom_call.1} parent=1 // loop_header
      %s28 = sphi 0, %s32
      %p29 = scmp.ge.s32.totalorder %s28, 4
      %s38 = sphi 0, %s40
      %s41 = sphi 0, %s38
      %s42 = sphi 0, %s41
      %s58 = sphi 0, %s42
      %s64 = sphi 0, %s66
      %s67 = sphi 0, %s64
      %s68 = sphi 0, %s67
      %s84 = sphi 0, %s68
      %s90 = sphi 0, %s92
      %s93 = sphi 0, %s90
      %s94 = sphi 0, %s93
      %s110 = sphi 0, %s94
      %s114 = sphi 0, %s114
      %s116 = sphi 0, %s114
      %s117 = sphi 0, %s116
      %s131 = sphi 0, %s117
      %s135 = sphi 0, %s135
      %s137 = sphi 0, %s135
      %s138 = sphi 0, %s137
      %s152 = sphi 0, %s138
      %s156 = sphi 0, %s156
      %s158 = sphi 0, %s156
      %s159 = sphi 0, %s158
      %s173 = sphi 0, %s159
      %s177 = sphi 0, %s177
      %s179 = sphi 0, %s177
      %s180 = sphi 0, %s179
      %s194 = sphi 0, %s180
      %s198 = sphi 0, %s198
      %s200 = sphi 0, %s198
      %s201 = sphi 0, %s200
      %s215 = sphi 0, %s201
      %s219 = sphi 0, %s219
      %s221 = sphi 0, %s219
      %s222 = sphi 0, %s221
      %s236 = sphi 0, %s222
      %s240 = sphi 0, %s240
      %s242 = sphi 0, %s240
      %s243 = sphi 0, %s242
      %s257 = sphi 0, %s243
      %s261 = sphi 0, %s261
      %s263 = sphi 0, %s261
      %s264 = sphi 0, %s263
      %s278 = sphi 0, %s264
      %s284 = sphi 0, %s286
      %s287 = sphi 0, %s284
      %s288 = sphi 0, %s287
      %s304 = sphi 0, %s288
    $region4: #{tpu_custom_call.1} parent=1 // loop_header_branch
      %31 = sbr.rel (%p29) target = $region8
    $region5: #{tpu_custom_call.1} parent=1 // loop_body
      %s33 = ssub.s32 %s28, 1
      %s34 = ssub.s32 %s28, 2
      %s35 = sadd.s32 %s28, 1
      %s36 = ssub.s32 %s28, %s35
      %p37 = scmp.eq.s32.totalorder %s36, 0
      %s39 = sadd.s32 %s38, 1
      %s40 = scalar_select %p37, %s38, %s39
      %p43 = pneg %p37
      %p44 = scmp.eq.s32.totalorder %s28, 1
      %p45 = por %p43, %p44
      %p46 = scmp.ne.s32.totalorder %s38, %s41
      %p47 = scmp.eq.s32.totalorder %s28, 0
      %p48 = por %p46, %p47
      %p49 = scmp.ne.s32.totalorder %s38, %s41
      %p50 = scmp.eq.s32.totalorder %s33, 1
      %p51 = por %p49, %p50
      %p52 = scmp.ne.s32.totalorder %s41, %s42
      %p53 = scmp.eq.s32.totalorder %s33, 0
      %p54 = por %p52, %p53
      %p55 = scmp.ne.s32.totalorder %s41, %s42
      %p56 = scmp.eq.s32.totalorder %s34, 1
      %p57 = por %p55, %p56
      %p59 = scmp.ne.s32.totalorder %s42, %s58
      %p60 = scmp.eq.s32.totalorder %s34, 0
      %p61 = por %p59, %p60
      %s62 = ssub.s32 %s28, %s35
      %p63 = scmp.eq.s32.totalorder %s62, 0
      %s65 = sadd.s32 %s64, 1
      %s66 = scalar_select %p63, %s64, %s65
      %p69 = pneg %p63
      %p70 = scmp.eq.s32.totalorder %s28, 1
      %p71 = por %p69, %p70
      %p72 = scmp.ne.s32.totalorder %s64, %s67
      %p73 = scmp.eq.s32.totalorder %s28, 0
      %p74 = por %p72, %p73
      %p75 = scmp.ne.s32.totalorder %s64, %s67
      %p76 = scmp.eq.s32.totalorder %s33, 1
      %p77 = por %p75, %p76
      %p78 = scmp.ne.s32.totalorder %s67, %s68
      %p79 = scmp.eq.s32.totalorder %s33, 0
      %p80 = por %p78, %p79
      %p81 = scmp.ne.s32.totalorder %s67, %s68
      %p82 = scmp.eq.s32.totalorder %s34, 1
      %p83 = por %p81, %p82
      %p85 = scmp.ne.s32.totalorder %s68, %s84
      %p86 = scmp.eq.s32.totalorder %s34, 0
      %p87 = por %p85, %p86
      %s88 = ssub.s32 %s28, %s35
      %p89 = scmp.eq.s32.totalorder %s88, 0
      %s91 = sadd.s32 %s90, 1
      %s92 = scalar_select %p89, %s90, %s91
      %p95 = pneg %p89
      %p96 = scmp.eq.s32.totalorder %s28, 1
      %p97 = por %p95, %p96
      %p98 = scmp.ne.s32.totalorder %s90, %s93
      %p99 = scmp.eq.s32.totalorder %s28, 0
      %p100 = por %p98, %p99
      %p101 = scmp.ne.s32.totalorder %s90, %s93
      %p102 = scmp.eq.s32.totalorder %s33, 1
      %p103 = por %p101, %p102
      %p104 = scmp.ne.s32.totalorder %s93, %s94
      %p105 = scmp.eq.s32.totalorder %s33, 0
      %p106 = por %p104, %p105
      %p107 = scmp.ne.s32.totalorder %s93, %s94
      %p108 = scmp.eq.s32.totalorder %s34, 1
      %p109 = por %p107, %p108
      %p111 = scmp.ne.s32.totalorder %s94, %s110
      %p112 = scmp.eq.s32.totalorder %s34, 0
      %p113 = por %p111, %p112
      %s115 = sadd.s32 %s114, 1
      %p118 = scmp.eq.s32.totalorder %s28, 1
      %p119 = scmp.ne.s32.totalorder %s114, %s116
      %p120 = scmp.eq.s32.totalorder %s28, 0
      %p121 = por %p119, %p120
      %p122 = scmp.ne.s32.totalorder %s114, %s116
      %p123 = scmp.eq.s32.totalorder %s33, 1
      %p124 = por %p122, %p123
      %p125 = scmp.ne.s32.totalorder %s116, %s117
      %p126 = scmp.eq.s32.totalorder %s33, 0
      %p127 = por %p125, %p126
      %p128 = scmp.ne.s32.totalorder %s116, %s117
      %p129 = scmp.eq.s32.totalorder %s34, 1
      %p130 = por %p128, %p129
      %p132 = scmp.ne.s32.totalorder %s117, %s131
      %p133 = scmp.eq.s32.totalorder %s34, 0
      %p134 = por %p132, %p133
      %s136 = sadd.s32 %s135, 1
      %p139 = scmp.eq.s32.totalorder %s28, 1
      %p140 = scmp.ne.s32.totalorder %s135, %s137
      %p141 = scmp.eq.s32.totalorder %s28, 0
      %p142 = por %p140, %p141
      %p143 = scmp.ne.s32.totalorder %s135, %s137
      %p144 = scmp.eq.s32.totalorder %s33, 1
      %p145 = por %p143, %p144
      %p146 = scmp.ne.s32.totalorder %s137, %s138
      %p147 = scmp.eq.s32.totalorder %s33, 0
      %p148 = por %p146, %p147
      %p149 = scmp.ne.s32.totalorder %s137, %s138
      %p150 = scmp.eq.s32.totalorder %s34, 1
      %p151 = por %p149, %p150
      %p153 = scmp.ne.s32.totalorder %s138, %s152
      %p154 = scmp.eq.s32.totalorder %s34, 0
      %p155 = por %p153, %p154
      %s157 = sadd.s32 %s156, 1
      %p160 = scmp.eq.s32.totalorder %s28, 1
      %p161 = scmp.ne.s32.totalorder %s156, %s158
      %p162 = scmp.eq.s32.totalorder %s28, 0
      %p163 = por %p161, %p162
      %p164 = scmp.ne.s32.totalorder %s156, %s158
      %p165 = scmp.eq.s32.totalorder %s33, 1
      %p166 = por %p164, %p165
      %p167 = scmp.ne.s32.totalorder %s158, %s159
      %p168 = scmp.eq.s32.totalorder %s33, 0
      %p169 = por %p167, %p168
      %p170 = scmp.ne.s32.totalorder %s158, %s159
      %p171 = scmp.eq.s32.totalorder %s34, 1
      %p172 = por %p170, %p171
      %p174 = scmp.ne.s32.totalorder %s159, %s173
      %p175 = scmp.eq.s32.totalorder %s34, 0
      %p176 = por %p174, %p175
      %s178 = sadd.s32 %s177, 1
      %p181 = scmp.eq.s32.totalorder %s28, 1
      %p182 = scmp.ne.s32.totalorder %s177, %s179
      %p183 = scmp.eq.s32.totalorder %s28, 0
      %p184 = por %p182, %p183
      %p185 = scmp.ne.s32.totalorder %s177, %s179
      %p186 = scmp.eq.s32.totalorder %s33, 1
      %p187 = por %p185, %p186
      %p188 = scmp.ne.s32.totalorder %s179, %s180
      %p189 = scmp.eq.s32.totalorder %s33, 0
      %p190 = por %p188, %p189
      %p191 = scmp.ne.s32.totalorder %s179, %s180
      %p192 = scmp.eq.s32.totalorder %s34, 1
      %p193 = por %p191, %p192
      %p195 = scmp.ne.s32.totalorder %s180, %s194
      %p196 = scmp.eq.s32.totalorder %s34, 0
      %p197 = por %p195, %p196
      %s199 = sadd.s32 %s198, 1
      %p202 = scmp.eq.s32.totalorder %s28, 1
      %p203 = scmp.ne.s32.totalorder %s198, %s200
      %p204 = scmp.eq.s32.totalorder %s28, 0
      %p205 = por %p203, %p204
      %p206 = scmp.ne.s32.totalorder %s198, %s200
      %p207 = scmp.eq.s32.totalorder %s33, 1
      %p208 = por %p206, %p207
      %p209 = scmp.ne.s32.totalorder %s200, %s201
      %p210 = scmp.eq.s32.totalorder %s33, 0
      %p211 = por %p209, %p210
      %p212 = scmp.ne.s32.totalorder %s200, %s201
      %p213 = scmp.eq.s32.totalorder %s34, 1
      %p214 = por %p212, %p213
      %p216 = scmp.ne.s32.totalorder %s201, %s215
      %p217 = scmp.eq.s32.totalorder %s34, 0
      %p218 = por %p216, %p217
      %s220 = sadd.s32 %s219, 1
      %p223 = scmp.eq.s32.totalorder %s28, 1
      %p224 = scmp.ne.s32.totalorder %s219, %s221
      %p225 = scmp.eq.s32.totalorder %s28, 0
      %p226 = por %p224, %p225
      %p227 = scmp.ne.s32.totalorder %s219, %s221
      %p228 = scmp.eq.s32.totalorder %s33, 1
      %p229 = por %p227, %p228
      %p230 = scmp.ne.s32.totalorder %s221, %s222
      %p231 = scmp.eq.s32.totalorder %s33, 0
      %p232 = por %p230, %p231
      %p233 = scmp.ne.s32.totalorder %s221, %s222
      %p234 = scmp.eq.s32.totalorder %s34, 1
      %p235 = por %p233, %p234
      %p237 = scmp.ne.s32.totalorder %s222, %s236
      %p238 = scmp.eq.s32.totalorder %s34, 0
      %p239 = por %p237, %p238
      %s241 = sadd.s32 %s240, 1
      %p244 = scmp.eq.s32.totalorder %s28, 1
      %p245 = scmp.ne.s32.totalorder %s240, %s242
      %p246 = scmp.eq.s32.totalorder %s28, 0
      %p247 = por %p245, %p246
      %p248 = scmp.ne.s32.totalorder %s240, %s242
      %p249 = scmp.eq.s32.totalorder %s33, 1
      %p250 = por %p248, %p249
      %p251 = scmp.ne.s32.totalorder %s242, %s243
      %p252 = scmp.eq.s32.totalorder %s33, 0
      %p253 = por %p251, %p252
      %p254 = scmp.ne.s32.totalorder %s242, %s243
      %p255 = scmp.eq.s32.totalorder %s34, 1
      %p256 = por %p254, %p255
      %p258 = scmp.ne.s32.totalorder %s243, %s257
      %p259 = scmp.eq.s32.totalorder %s34, 0
      %p260 = por %p258, %p259
      %s262 = sadd.s32 %s261, 1
      %p265 = scmp.eq.s32.totalorder %s28, 1
      %p266 = scmp.ne.s32.totalorder %s261, %s263
      %p267 = scmp.eq.s32.totalorder %s28, 0
      %p268 = por %p266, %p267
      %p269 = scmp.ne.s32.totalorder %s261, %s263
      %p270 = scmp.eq.s32.totalorder %s33, 1
      %p271 = por %p269, %p270
      %p272 = scmp.ne.s32.totalorder %s263, %s264
      %p273 = scmp.eq.s32.totalorder %s33, 0
      %p274 = por %p272, %p273
      %p275 = scmp.ne.s32.totalorder %s263, %s264
      %p276 = scmp.eq.s32.totalorder %s34, 1
      %p277 = por %p275, %p276
      %p279 = scmp.ne.s32.totalorder %s264, %s278
      %p280 = scmp.eq.s32.totalorder %s34, 0
      %p281 = por %p279, %p280
      %s282 = ssub.s32 %s28, %s35
      %p283 = scmp.eq.s32.totalorder %s282, 0
      %s285 = sadd.s32 %s284, 1
      %s286 = scalar_select %p283, %s284, %s285
      %p289 = pneg %p283
      %p290 = scmp.eq.s32.totalorder %s28, 1
      %p291 = por %p289, %p290
      %p292 = scmp.ne.s32.totalorder %s284, %s287
      %p293 = scmp.eq.s32.totalorder %s28, 0
      %p294 = por %p292, %p293
      %p295 = scmp.ne.s32.totalorder %s284, %s287
      %p296 = scmp.eq.s32.totalorder %s33, 1
      %p297 = por %p295, %p296
      %p298 = scmp.ne.s32.totalorder %s287, %s288
      %p299 = scmp.eq.s32.totalorder %s33, 0
      %p300 = por %p298, %p299
      %p301 = scmp.ne.s32.totalorder %s287, %s288
      %p302 = scmp.eq.s32.totalorder %s34, 1
      %p303 = por %p301, %p302
      %p305 = scmp.ne.s32.totalorder %s288, %s304
      %p306 = scmp.eq.s32.totalorder %s34, 0
      %p307 = por %p305, %p306
      %p308 = scmp.le.s32.totalorder 1, %s28
      %p309 = scmp.lt.s32.totalorder %s28, 3
      %p310 = pnand %p308, %p309
      %p311 = pneg %p310
      // Predicated region
      $region9: #{tpu_custom_call.1} parent=5 // pred_check
        _
      $region10: #{tpu_custom_call.1} parent=5 // pred_check_branch
        %313 = sbr.rel (%p310) target = $region12
      $region11: #{tpu_custom_call.1} parent=5 // pred_region
        %s314 = ssub.s32 %s28, 1
        // Predicated region
        $region13: #{tpu_custom_call.1} parent=11 // pred_check
          %p315 = pneg %p127
        $region14: #{tpu_custom_call.1} parent=11 // pred_check_branch
          %317 = sbr.rel (%p315) target = $region16
        $region15: #{tpu_custom_call.1} parent=11 // pred_region
          %s319 = ssub.s32 512, 512
          %320 = vsyncadd [#allocation9], %s319
          %s321 = sshll.u32 [#allocation8], 4
          %s322 = int_to_ptr.vmem [resolvable:$true] %s321
          %327 = dma.hbm_to_vmem [thread:$0]  %s3, 512, %s322, [#allocation9], 128, 128, 8
        $region16: #{tpu_custom_call.1} parent=11 // pred_fallthru
          _
        // Predicated region
        $region17: #{tpu_custom_call.1} parent=11 // pred_check
          %p328 = pneg %p148
        $region18: #{tpu_custom_call.1} parent=11 // pred_check_branch
          %330 = sbr.rel (%p328) target = $region20
        $region19: #{tpu_custom_call.1} parent=11 // pred_region
          _
        $region20: #{tpu_custom_call.1} parent=11 // pred_fallthru
          _
        // Predicated region
        $region21: #{tpu_custom_call.1} parent=11 // pred_check
          %p331 = pneg %p169
        $region22: #{tpu_custom_call.1} parent=11 // pred_check_branch
          %333 = sbr.rel (%p331) target = $region24
        $region23: #{tpu_custom_call.1} parent=11 // pred_region
          %s335 = ssub.s32 512, 512
          %336 = vsyncadd [#allocation9], %s335
          %s337 = sshll.u32 [#allocation10], 4
          %s338 = int_to_ptr.vmem [resolvable:$true] %s337
          %343 = dma.hbm_to_vmem [thread:$0]  %s5, 512, %s338, [#allocation9], 128, 128, 8
        $region24: #{tpu_custom_call.1} parent=11 // pred_fallthru
          _
        // Predicated region
        $region25: #{tpu_custom_call.1} parent=11 // pred_check
          %p344 = pneg %p190
        $region26: #{tpu_custom_call.1} parent=11 // pred_check_branch
          %346 = sbr.rel (%p344) target = $region28
        $region27: #{tpu_custom_call.1} parent=11 // pred_region
          _
        $region28: #{tpu_custom_call.1} parent=11 // pred_fallthru
          _
        // Predicated region
        $region29: #{tpu_custom_call.1} parent=11 // pred_check
          %p347 = pneg %p211
        $region30: #{tpu_custom_call.1} parent=11 // pred_check_branch
          %349 = sbr.rel (%p347) target = $region32
        $region31: #{tpu_custom_call.1} parent=11 // pred_region
          %s351 = ssub.s32 512, 512
          %352 = vsyncadd [#allocation12], %s351
          %s353 = sshll.u32 [#allocation11], 4
          %s354 = int_to_ptr.vmem [resolvable:$true] %s353
          %359 = dma.hbm_to_vmem [thread:$0]  %s7, 512, %s354, [#allocation12], 128, 128, 8
        $region32: #{tpu_custom_call.1} parent=11 // pred_fallthru
          _
        // Predicated region
        $region33: #{tpu_custom_call.1} parent=11 // pred_check
          %p360 = pneg %p232
        $region34: #{tpu_custom_call.1} parent=11 // pred_check_branch
          %362 = sbr.rel (%p360) target = $region36
        $region35: #{tpu_custom_call.1} parent=11 // pred_region
          _
        $region36: #{tpu_custom_call.1} parent=11 // pred_fallthru
          _
        // Predicated region
        $region37: #{tpu_custom_call.1} parent=11 // pred_check
          %p363 = pneg %p253
        $region38: #{tpu_custom_call.1} parent=11 // pred_check_branch
          %365 = sbr.rel (%p363) target = $region40
        $region39: #{tpu_custom_call.1} parent=11 // pred_region
          %s367 = ssub.s32 512, 512
          %368 = vsyncadd [#allocation12], %s367
          %s369 = sshll.u32 [#allocation13], 4
          %s370 = int_to_ptr.vmem [resolvable:$true] %s369
          %375 = dma.hbm_to_vmem [thread:$0]  %s9, 512, %s370, [#allocation12], 128, 128, 8
        $region40: #{tpu_custom_call.1} parent=11 // pred_fallthru
          _
        // Predicated region
        $region41: #{tpu_custom_call.1} parent=11 // pred_check
          %p376 = pneg %p274
        $region42: #{tpu_custom_call.1} parent=11 // pred_check_branch
          %378 = sbr.rel (%p376) target = $region44
        $region43: #{tpu_custom_call.1} parent=11 // pred_region
          _
        $region44: #{tpu_custom_call.1} parent=11 // pred_fallthru
          _
      $region12: #{tpu_custom_call.1} parent=5 // pred_fallthru
        _
      %p379 = scmp.lt.s32.totalorder %s28, 2
      // Predicated region
      $region45: #{tpu_custom_call.1} parent=5 // pred_check
        %p380 = pneg %p379
      $region46: #{tpu_custom_call.1} parent=5 // pred_check_branch
        %382 = sbr.rel (%p380) target = $region48
      $region47: #{tpu_custom_call.1} parent=5 // pred_region
        // Predicated region
        $region49: #{tpu_custom_call.1} parent=47 // pred_check
          %p383 = pneg %p48
        $region50: #{tpu_custom_call.1} parent=47 // pred_check_branch
          %385 = sbr.rel (%p383) target = $region52
        $region51: #{tpu_custom_call.1} parent=47 // pred_region
          %s386 = sand.u32 %s38, 1
          %s387 = scalar_lea.sflag [#allocation3], %s386
          %s388 = sand.u32 %s38, 1
          %s389 = smul.addr %s388, 8
          %s390 = scalar_lea.vmem [#allocation2], %s389
          %s392 = ssub.s32 128, 128
          %393 = vsyncadd %s387, %s392
          %s394 = smul.addr %s28, 128
          %s395 = scalar_lea.hbm %s0, %s394
          %s397 = sshll.u32 %s390, 4
          %s398 = int_to_ptr.vmem [resolvable:$true] %s397
          %400 = dma.hbm_to_vmem [thread:$0]  %s395, 128, %s398, %s387
        $region52: #{tpu_custom_call.1} parent=47 // pred_fallthru
          _
        // Predicated region
        $region53: #{tpu_custom_call.1} parent=47 // pred_check
          %p401 = pneg %p74
        $region54: #{tpu_custom_call.1} parent=47 // pred_check_branch
          %403 = sbr.rel (%p401) target = $region56
        $region55: #{tpu_custom_call.1} parent=47 // pred_region
          %s404 = sand.u32 %s28, 1
          %s405 = scalar_lea.sflag [#allocation6], %s404
          %s406 = sand.u32 %s64, 1
          %s407 = smul.addr %s406, 8
          %s408 = scalar_lea.vmem [#allocation5], %s407
          %s410 = ssub.s32 128, 128
          %411 = vsyncadd %s405, %s410
          %s412 = smul.addr %s28, 128
          %s413 = scalar_lea.hbm %s1, %s412
          %s415 = sshll.u32 %s408, 4
          %s416 = int_to_ptr.vmem [resolvable:$true] %s415
          %418 = dma.hbm_to_vmem [thread:$0]  %s413, 128, %s416, %s405
        $region56: #{tpu_custom_call.1} parent=47 // pred_fallthru
          _
        // Predicated region
        $region57: #{tpu_custom_call.1} parent=47 // pred_check
          %p419 = pneg %p100
        $region58: #{tpu_custom_call.1} parent=47 // pred_check_branch
          %421 = sbr.rel (%p419) target = $region60
        $region59: #{tpu_custom_call.1} parent=47 // pred_region
          %s422 = sand.u32 %s28, 1
          %s423 = scalar_lea.sflag [#allocation6], %s422
          %s424 = sand.u32 %s90, 1
          %s425 = smul.addr %s424, 8
          %s426 = scalar_lea.vmem [#allocation7], %s425
          %s428 = ssub.s32 128, 128
          %429 = vsyncadd %s423, %s428
          %s430 = smul.addr %s28, 128
          %s431 = scalar_lea.hbm %s2, %s430
          %s433 = sshll.u32 %s426, 4
          %s434 = int_to_ptr.vmem [resolvable:$true] %s433
          %436 = dma.hbm_to_vmem [thread:$0]  %s431, 128, %s434, %s423
        $region60: #{tpu_custom_call.1} parent=47 // pred_fallthru
          _
      $region48: #{tpu_custom_call.1} parent=5 // pred_fallthru
        _
      %p437 = scmp.le.s32.totalorder 1, %s28
      %p438 = scmp.lt.s32.totalorder %s28, 3
      %p439 = pnand %p437, %p438
      %p440 = pneg %p439
      // Predicated region
      $region61: #{tpu_custom_call.1} parent=5 // pred_check
        _
      $region62: #{tpu_custom_call.1} parent=5 // pred_check_branch
        %442 = sbr.rel (%p439) target = $region64
      $region63: #{tpu_custom_call.1} parent=5 // pred_region
        %s443 = ssub.s32 %s28, 1
        %s444 = sand.u32 %s41, 1
        %s445 = scalar_lea.sflag [#allocation3], %s444
        %s446 = sand.u32 %s41, 1
        %s447 = smul.addr %s446, 8
        %s448 = scalar_lea.vmem [#allocation2], %s447
        // Predicated region
        $region65: #{tpu_custom_call.1} parent=63 // pred_check
          %p449 = pneg %p54
        $region66: #{tpu_custom_call.1} parent=63 // pred_check_branch
          %451 = sbr.rel (%p449) target = $region68
        $region67: #{tpu_custom_call.1} parent=63 // pred_region
          %452 = dma.done %s445, 128
        $region68: #{tpu_custom_call.1} parent=63 // pred_fallthru
          _
        %s453 = sand.u32 %s33, 1
        %s454 = scalar_lea.sflag [#allocation6], %s453
        %s455 = sand.u32 %s67, 1
        %s456 = smul.addr %s455, 8
        %s457 = scalar_lea.vmem [#allocation5], %s456
        // Predicated region
        $region69: #{tpu_custom_call.1} parent=63 // pred_check
          %p458 = pneg %p80
        $region70: #{tpu_custom_call.1} parent=63 // pred_check_branch
          %460 = sbr.rel (%p458) target = $region72
        $region71: #{tpu_custom_call.1} parent=63 // pred_region
          %461 = dma.done %s454, 128
        $region72: #{tpu_custom_call.1} parent=63 // pred_fallthru
          _
        %s462 = sand.u32 %s33, 1
        %s463 = scalar_lea.sflag [#allocation6], %s462
        %s464 = sand.u32 %s93, 1
        %s465 = smul.addr %s464, 8
        %s466 = scalar_lea.vmem [#allocation7], %s465
        // Predicated region
        $region73: #{tpu_custom_call.1} parent=63 // pred_check
          %p467 = pneg %p106
        $region74: #{tpu_custom_call.1} parent=63 // pred_check_branch
          %469 = sbr.rel (%p467) target = $region76
        $region75: #{tpu_custom_call.1} parent=63 // pred_region
          %470 = dma.done %s463, 128
        $region76: #{tpu_custom_call.1} parent=63 // pred_fallthru
          _
        // Predicated region
        $region77: #{tpu_custom_call.1} parent=63 // pred_check
          %p471 = pneg %p127
        $region78: #{tpu_custom_call.1} parent=63 // pred_check_branch
          %473 = sbr.rel (%p471) target = $region80
        $region79: #{tpu_custom_call.1} parent=63 // pred_region
          %474 = dma.done [#allocation9], 512
        $region80: #{tpu_custom_call.1} parent=63 // pred_fallthru
          _
        // Predicated region
        $region81: #{tpu_custom_call.1} parent=63 // pred_check
          %p475 = pneg %p169
        $region82: #{tpu_custom_call.1} parent=63 // pred_check_branch
          %477 = sbr.rel (%p475) target = $region84
        $region83: #{tpu_custom_call.1} parent=63 // pred_region
          %478 = dma.done [#allocation9], 512
        $region84: #{tpu_custom_call.1} parent=63 // pred_fallthru
          _
        // Predicated region
        $region85: #{tpu_custom_call.1} parent=63 // pred_check
          %p479 = pneg %p211
        $region86: #{tpu_custom_call.1} parent=63 // pred_check_branch
          %481 = sbr.rel (%p479) target = $region88
        $region87: #{tpu_custom_call.1} parent=63 // pred_region
          %482 = dma.done [#allocation12], 512
        $region88: #{tpu_custom_call.1} parent=63 // pred_fallthru
          _
        // Predicated region
        $region89: #{tpu_custom_call.1} parent=63 // pred_check
          %p483 = pneg %p253
        $region90: #{tpu_custom_call.1} parent=63 // pred_check_branch
          %485 = sbr.rel (%p483) target = $region92
        $region91: #{tpu_custom_call.1} parent=63 // pred_region
          %486 = dma.done [#allocation12], 512
        $region92: #{tpu_custom_call.1} parent=63 // pred_fallthru
          _
        %s487 = sand.u32 %s41, 1
        %s488 = scalar_lea.sflag [#allocation3], %s487
        %s489 = sand.u32 %s41, 1
        %s490 = smul.addr %s489, 8
        %s491 = scalar_lea.vmem [#allocation2], %s490
        %p492 = pneg %p54
        %p493 = pneg %p51
        %s494 = sand.u32 %s33, 1
        %s495 = scalar_lea.sflag [#allocation6], %s494
        %s496 = sand.u32 %s67, 1
        %s497 = smul.addr %s496, 8
        %s498 = scalar_lea.vmem [#allocation5], %s497
        %p499 = pneg %p80
        %p500 = pneg %p77
        %s501 = sand.u32 %s33, 1
        %s502 = scalar_lea.sflag [#allocation6], %s501
        %s503 = sand.u32 %s93, 1
        %s504 = smul.addr %s503, 8
        %s505 = scalar_lea.vmem [#allocation7], %s504
        %p506 = pneg %p106
        %p507 = pneg %p103
        %p508 = pneg %p127
        %p509 = pneg %p124
        %p510 = pneg %p148
        %p511 = pneg %p145
        %p512 = pneg %p169
        %p513 = pneg %p166
        %p514 = pneg %p190
        %p515 = pneg %p187
        %p516 = pneg %p211
        %p517 = pneg %p208
        %p518 = pneg %p232
        %p519 = pneg %p229
        %p520 = pneg %p253
        %p521 = pneg %p250
        %p522 = pneg %p274
        %p523 = pneg %p271
        %p524 = pneg %p300
        %p525 = pneg %p297
        %s526 = sand.u32 %s287, 1
        %s527 = scalar_lea.sflag [#allocation4], %s526
        %s528 = sand.u32 %s287, 1
        %s529 = smul.addr %s528, 8
        %s530 = scalar_lea.vmem [#allocation14], %s529
        %v531 = vld [vmem:[%s448] sm:$0xff]
        %v532 = vld [vmem:[#allocation8] sm:$0xff]
        %v533 = vld [vmem:[#allocation8 + $0x8] sm:$0xff]
        %v534 = vld [vmem:[#allocation8 + $0x10] sm:$0xff]
        %v535 = vld [vmem:[#allocation8 + $0x18] sm:$0xff]
        %v536 = vld [vmem:[%s4] sm:$0x1]
        %v538 = vlaneseq
        %v539 = vshrl.u32 %v538, 7
        %v540 = vsub.s32 0, %v539
        %v541 = vrot.slane %v536, %v540
        %vm543 = vcmask 261120
        %v545 = vsel %vm543, %v531, 0
        %547 = vmatprep.subr.mxu0 0.0
        %548 = vmatpush1.msra.mxu0 0.0
        %549 = vmatprep.subr.mxu0 0.0
        %550 = vmatpush1.msra.mxu0 0.0
        %551 = vmatprep.subr.mxu0 0.0
        %552 = vmatpush1.msra.mxu0 0.0
        %553 = vmatprep.subr.mxu0 0.0
        %554 = vmatpush1.msra.mxu0 0.0
        %555 = vmatprep.subr.mxu0 0.0
        %556 = vmatpush1.msra.mxu0 0.0
        %557 = vmatprep.subr.mxu0 0.0
        %558 = vmatpush1.msra.mxu0 0.0
        %559 = vmatprep.subr.mxu0 0.0
        %560 = vmatpush1.msra.mxu0 0.0
        %561 = vmatprep.subr.mxu0 0.0
        %562 = vmatpush1.msra.mxu0 0.0
        %563 = vmatprep.subr.mxu0 0.0
        %564 = vmatpush1.msra.mxu0 0.0
        %565 = vmatprep.subr.mxu0 0.0
        %566 = vmatpush1.msra.mxu0 0.0
        %567 = vmatprep.subr.mxu0 0.0
        %568 = vmatpush1.msra.mxu0 0.0
        %569 = vmatprep.subr.mxu0 0.0
        %570 = vmatpush1.msra.mxu0 0.0
        %571 = vmatprep.subr.mxu0 0.0
        %572 = vmatpush1.msra.mxu0 %v535
        %573 = vmatprep.subr.mxu0 0.0
        %574 = vmatpush1.msra.mxu0 %v534
        %575 = vmatprep.subr.mxu0 0.0
        %576 = vmatpush1.msra.mxu0 %v533
        %577 = vmatprep.subr.mxu0 0.0
        %578 = vmatpush1.msra.mxu0 %v532
        %579 = vmatprep.subr.mxu0 0.0
        %580 = vmatpush2.msra.mxu0 0.0
        %581 = vmatprep.subr.mxu0 0.0
        %582 = vmatpush2.msra.mxu0 0.0
        %583 = vmatprep.subr.mxu0 0.0
        %584 = vmatpush2.msra.mxu0 0.0
        %585 = vmatprep.subr.mxu0 0.0
        %586 = vmatpush2.msra.mxu0 0.0
        %587 = vmatprep.subr.mxu0 0.0
        %588 = vmatpush2.msra.mxu0 0.0
        %589 = vmatprep.subr.mxu0 0.0
        %590 = vmatpush2.msra.mxu0 0.0
        %591 = vmatprep.subr.mxu0 0.0
        %592 = vmatpush2.msra.mxu0 0.0
        %593 = vmatprep.subr.mxu0 0.0
        %594 = vmatpush2.msra.mxu0 0.0
        %595 = vmatprep.subr.mxu0 0.0
        %596 = vmatpush2.msra.mxu0 0.0
        %597 = vmatprep.subr.mxu0 0.0
        %598 = vmatpush2.msra.mxu0 0.0
        %599 = vmatprep.subr.mxu0 0.0
        %600 = vmatpush2.msra.mxu0 0.0
        %601 = vmatprep.subr.mxu0 0.0
        %602 = vmatpush2.msra.mxu0 0.0
        %603 = vmatprep.subr.mxu0 0.0
        %604 = vmatpush2.msra.mxu0 0.0
        %605 = vmatprep.subr.mxu0 0.0
        %606 = vmatpush2.msra.mxu0 0.0
        %607 = vmatprep.subr.mxu0 0.0
        %608 = vmatpush2.msra.mxu0 0.0
        %609 = vmatprep.subr.mxu0 0.0
        %610 = vmatpush2.msra.mxu0 0.0
        %611 = vmatprep.mubr.f32.mxu0 0.0
        %612 = vmatmul.mubr.f32.gmra.mxu0 %v545
        %v613 = vpop.f32.mrf.mxu0
        %v614 = vadd.f32 %v541, %v613
        %v615 = vpop.f32.mrf.mxu0
        %616 = vdwg.mxu0
        %v617 = vld [vmem:[%s457] sm:$0xff]
        %v618 = vld [vmem:[#allocation10] sm:$0xff]
        %v619 = vld [vmem:[#allocation10 + $0x8] sm:$0xff]
        %v620 = vld [vmem:[#allocation10 + $0x10] sm:$0xff]
        %v621 = vld [vmem:[#allocation10 + $0x18] sm:$0xff]
        %v622 = vld [vmem:[%s6] sm:$0x1]
        %v624 = vlaneseq
        %v625 = vshrl.u32 %v624, 7
        %v626 = vsub.s32 0, %v625
        %v627 = vrot.slane %v622, %v626
        %v630 = vsel %vm543, %v617, 0
        %632 = vmatprep.subr.mxu0 0.0
        %633 = vmatpush1.msra.mxu0 0.0
        %634 = vmatprep.subr.mxu0 0.0
        %635 = vmatpush1.msra.mxu0 0.0
        %636 = vmatprep.subr.mxu0 0.0
        %637 = vmatpush1.msra.mxu0 0.0
        %638 = vmatprep.subr.mxu0 0.0
        %639 = vmatpush1.msra.mxu0 0.0
        %640 = vmatprep.subr.mxu0 0.0
        %641 = vmatpush1.msra.mxu0 0.0
        %642 = vmatprep.subr.mxu0 0.0
        %643 = vmatpush1.msra.mxu0 0.0
        %644 = vmatprep.subr.mxu0 0.0
        %645 = vmatpush1.msra.mxu0 0.0
        %646 = vmatprep.subr.mxu0 0.0
        %647 = vmatpush1.msra.mxu0 0.0
        %648 = vmatprep.subr.mxu0 0.0
        %649 = vmatpush1.msra.mxu0 0.0
        %650 = vmatprep.subr.mxu0 0.0
        %651 = vmatpush1.msra.mxu0 0.0
        %652 = vmatprep.subr.mxu0 0.0
        %653 = vmatpush1.msra.mxu0 0.0
        %654 = vmatprep.subr.mxu0 0.0
        %655 = vmatpush1.msra.mxu0 0.0
        %656 = vmatprep.subr.mxu0 0.0
        %657 = vmatpush1.msra.mxu0 %v621
        %658 = vmatprep.subr.mxu0 0.0
        %659 = vmatpush1.msra.mxu0 %v620
        %660 = vmatprep.subr.mxu0 0.0
        %661 = vmatpush1.msra.mxu0 %v619
        %662 = vmatprep.subr.mxu0 0.0
        %663 = vmatpush1.msra.mxu0 %v618
        %664 = vmatprep.subr.mxu0 0.0
        %665 = vmatpush2.msra.mxu0 0.0
        %666 = vmatprep.subr.mxu0 0.0
        %667 = vmatpush2.msra.mxu0 0.0
        %668 = vmatprep.subr.mxu0 0.0
        %669 = vmatpush2.msra.mxu0 0.0
        %670 = vmatprep.subr.mxu0 0.0
        %671 = vmatpush2.msra.mxu0 0.0
        %672 = vmatprep.subr.mxu0 0.0
        %673 = vmatpush2.msra.mxu0 0.0
        %674 = vmatprep.subr.mxu0 0.0
        %675 = vmatpush2.msra.mxu0 0.0
        %676 = vmatprep.subr.mxu0 0.0
        %677 = vmatpush2.msra.mxu0 0.0
        %678 = vmatprep.subr.mxu0 0.0
        %679 = vmatpush2.msra.mxu0 0.0
        %680 = vmatprep.subr.mxu0 0.0
        %681 = vmatpush2.msra.mxu0 0.0
        %682 = vmatprep.subr.mxu0 0.0
        %683 = vmatpush2.msra.mxu0 0.0
        %684 = vmatprep.subr.mxu0 0.0
        %685 = vmatpush2.msra.mxu0 0.0
        %686 = vmatprep.subr.mxu0 0.0
        %687 = vmatpush2.msra.mxu0 0.0
        %688 = vmatprep.subr.mxu0 0.0
        %689 = vmatpush2.msra.mxu0 0.0
        %690 = vmatprep.subr.mxu0 0.0
        %691 = vmatpush2.msra.mxu0 0.0
        %692 = vmatprep.subr.mxu0 0.0
        %693 = vmatpush2.msra.mxu0 0.0
        %694 = vmatprep.subr.mxu0 0.0
        %695 = vmatpush2.msra.mxu0 0.0
        %696 = vmatprep.mubr.f32.mxu0 0.0
        %697 = vmatmul.mubr.f32.gmra.mxu0 %v630
        %v698 = vpop.f32.mrf.mxu0
        %v699 = vadd.f32 %v627, %v698
        %v700 = vpop.f32.mrf.mxu0
        %701 = vdwg.mxu0
        %v702 = vld [vmem:[%s466] sm:$0xff]
        %v703 = vld [vmem:[#allocation11] sm:$0xff]
        %v704 = vld [vmem:[#allocation11 + $0x8] sm:$0xff]
        %v705 = vld [vmem:[#allocation11 + $0x10] sm:$0xff]
        %v706 = vld [vmem:[#allocation11 + $0x18] sm:$0xff]
        %v707 = vld [vmem:[%s8] sm:$0x1]
        %v709 = vlaneseq
        %v710 = vshrl.u32 %v709, 7
        %v711 = vsub.s32 0, %v710
        %v712 = vrot.slane %v707, %v711
        %v715 = vsel %vm543, %v702, 0
        %717 = vmatprep.subr.mxu0 0.0
        %718 = vmatpush1.msra.mxu0 0.0
        %719 = vmatprep.subr.mxu0 0.0
        %720 = vmatpush1.msra.mxu0 0.0
        %721 = vmatprep.subr.mxu0 0.0
        %722 = vmatpush1.msra.mxu0 0.0
        %723 = vmatprep.subr.mxu0 0.0
        %724 = vmatpush1.msra.mxu0 0.0
        %725 = vmatprep.subr.mxu0 0.0
        %726 = vmatpush1.msra.mxu0 0.0
        %727 = vmatprep.subr.mxu0 0.0
        %728 = vmatpush1.msra.mxu0 0.0
        %729 = vmatprep.subr.mxu0 0.0
        %730 = vmatpush1.msra.mxu0 0.0
        %731 = vmatprep.subr.mxu0 0.0
        %732 = vmatpush1.msra.mxu0 0.0
        %733 = vmatprep.subr.mxu0 0.0
        %734 = vmatpush1.msra.mxu0 0.0
        %735 = vmatprep.subr.mxu0 0.0
        %736 = vmatpush1.msra.mxu0 0.0
        %737 = vmatprep.subr.mxu0 0.0
        %738 = vmatpush1.msra.mxu0 0.0
        %739 = vmatprep.subr.mxu0 0.0
        %740 = vmatpush1.msra.mxu0 0.0
        %741 = vmatprep.subr.mxu0 0.0
        %742 = vmatpush1.msra.mxu0 %v706
        %743 = vmatprep.subr.mxu0 0.0
        %744 = vmatpush1.msra.mxu0 %v705
        %745 = vmatprep.subr.mxu0 0.0
        %746 = vmatpush1.msra.mxu0 %v704
        %747 = vmatprep.subr.mxu0 0.0
        %748 = vmatpush1.msra.mxu0 %v703
        %749 = vmatprep.subr.mxu0 0.0
        %750 = vmatpush2.msra.mxu0 0.0
        %751 = vmatprep.subr.mxu0 0.0
        %752 = vmatpush2.msra.mxu0 0.0
        %753 = vmatprep.subr.mxu0 0.0
        %754 = vmatpush2.msra.mxu0 0.0
        %755 = vmatprep.subr.mxu0 0.0
        %756 = vmatpush2.msra.mxu0 0.0
        %757 = vmatprep.subr.mxu0 0.0
        %758 = vmatpush2.msra.mxu0 0.0
        %759 = vmatprep.subr.mxu0 0.0
        %760 = vmatpush2.msra.mxu0 0.0
        %761 = vmatprep.subr.mxu0 0.0
        %762 = vmatpush2.msra.mxu0 0.0
        %763 = vmatprep.subr.mxu0 0.0
        %764 = vmatpush2.msra.mxu0 0.0
        %765 = vmatprep.subr.mxu0 0.0
        %766 = vmatpush2.msra.mxu0 0.0
        %767 = vmatprep.subr.mxu0 0.0
        %768 = vmatpush2.msra.mxu0 0.0
        %769 = vmatprep.subr.mxu0 0.0
        %770 = vmatpush2.msra.mxu0 0.0
        %771 = vmatprep.subr.mxu0 0.0
        %772 = vmatpush2.msra.mxu0 0.0
        %773 = vmatprep.subr.mxu0 0.0
        %774 = vmatpush2.msra.mxu0 0.0
        %775 = vmatprep.subr.mxu0 0.0
        %776 = vmatpush2.msra.mxu0 0.0
        %777 = vmatprep.subr.mxu0 0.0
        %778 = vmatpush2.msra.mxu0 0.0
        %779 = vmatprep.subr.mxu0 0.0
        %780 = vmatpush2.msra.mxu0 0.0
        %781 = vmatprep.mubr.f32.mxu0 0.0
        %782 = vmatmul.mubr.f32.gmra.mxu0 %v715
        %v783 = vpop.f32.mrf.mxu0
        %v784 = vadd.f32 %v712, %v783
        %v785 = vpop.f32.mrf.mxu0
        %786 = vdwg.mxu0
        %vm787 = vcmask 64512
        %v789 = vsel %vm787, %v614, 0
        %v792 = vsel %vm787, %v699, 0
        %794 = vmatprep.subr.mxu0 0.0
        %795 = vmatpush1.xpose.msra.mxu0 0.0
        %796 = vmatprep.subr.mxu0 0.0
        %797 = vmatpush1.xpose.msra.mxu0 0.0
        %798 = vmatprep.subr.mxu0 0.0
        %799 = vmatpush1.xpose.msra.mxu0 0.0
        %800 = vmatprep.subr.mxu0 0.0
        %801 = vmatpush1.xpose.msra.mxu0 0.0
        %802 = vmatprep.subr.mxu0 0.0
        %803 = vmatpush1.xpose.msra.mxu0 0.0
        %804 = vmatprep.subr.mxu0 0.0
        %805 = vmatpush1.xpose.msra.mxu0 0.0
        %806 = vmatprep.subr.mxu0 0.0
        %807 = vmatpush1.xpose.msra.mxu0 0.0
        %808 = vmatprep.subr.mxu0 0.0
        %809 = vmatpush1.xpose.msra.mxu0 0.0
        %810 = vmatprep.subr.mxu0 0.0
        %811 = vmatpush1.xpose.msra.mxu0 0.0
        %812 = vmatprep.subr.mxu0 0.0
        %813 = vmatpush1.xpose.msra.mxu0 0.0
        %814 = vmatprep.subr.mxu0 0.0
        %815 = vmatpush1.xpose.msra.mxu0 0.0
        %816 = vmatprep.subr.mxu0 0.0
        %817 = vmatpush1.xpose.msra.mxu0 0.0
        %818 = vmatprep.subr.mxu0 0.0
        %819 = vmatpush1.xpose.msra.mxu0 0.0
        %820 = vmatprep.subr.mxu0 0.0
        %821 = vmatpush1.xpose.msra.mxu0 0.0
        %822 = vmatprep.subr.mxu0 0.0
        %823 = vmatpush1.xpose.msra.mxu0 0.0
        %824 = vmatprep.subr.mxu0 0.0
        %825 = vmatpush1.xpose.msra.mxu0 %v792
        %826 = vmatprep.subr.mxu0 0.0
        %827 = vmatpush2.xpose.msra.mxu0 0.0
        %828 = vmatprep.subr.mxu0 0.0
        %829 = vmatpush2.xpose.msra.mxu0 0.0
        %830 = vmatprep.subr.mxu0 0.0
        %831 = vmatpush2.xpose.msra.mxu0 0.0
        %832 = vmatprep.subr.mxu0 0.0
        %833 = vmatpush2.xpose.msra.mxu0 0.0
        %834 = vmatprep.subr.mxu0 0.0
        %835 = vmatpush2.xpose.msra.mxu0 0.0
        %836 = vmatprep.subr.mxu0 0.0
        %837 = vmatpush2.xpose.msra.mxu0 0.0
        %838 = vmatprep.subr.mxu0 0.0
        %839 = vmatpush2.xpose.msra.mxu0 0.0
        %840 = vmatprep.subr.mxu0 0.0
        %841 = vmatpush2.xpose.msra.mxu0 0.0
        %842 = vmatprep.subr.mxu0 0.0
        %843 = vmatpush2.xpose.msra.mxu0 0.0
        %844 = vmatprep.subr.mxu0 0.0
        %845 = vmatpush2.xpose.msra.mxu0 0.0
        %846 = vmatprep.subr.mxu0 0.0
        %847 = vmatpush2.xpose.msra.mxu0 0.0
        %848 = vmatprep.subr.mxu0 0.0
        %849 = vmatpush2.xpose.msra.mxu0 0.0
        %850 = vmatprep.subr.mxu0 0.0
        %851 = vmatpush2.xpose.msra.mxu0 0.0
        %852 = vmatprep.subr.mxu0 0.0
        %853 = vmatpush2.xpose.msra.mxu0 0.0
        %854 = vmatprep.subr.mxu0 0.0
        %855 = vmatpush2.xpose.msra.mxu0 0.0
        %856 = vmatprep.subr.mxu0 0.0
        %857 = vmatpush2.xpose.msra.mxu0 0.0
        %858 = vmatprep.mubr.f32.mxu0 0.0
        %859 = vmatmul.mubr.f32.gmra.mxu0 %v789
        %v860 = vpop.f32.mrf.mxu0
        %v861 = vadd.f32 0.0, %v860
        %v862 = vpop.f32.mrf.mxu0
        %863 = vdwg.mxu0
        %v864 = vsel %vm787, %v861, -inf
        %865 = vmax.xlane.f32.xlu0 %v864
        %v866 = vpop.xlane.xlu0 %865
        %v867 = vsub.f32 %v861, %v866
        %v868 = vmul.f32 %v867, 1.442695
        %v869 = vpow.pop %v868
        %v870 = vsel %vm787, %v869, 0.0
        %871 = vadd.xlane.f32.xlu0 %v870
        %v872 = vpop.xlane.xlu0 %871
        %v873 = vrcp.pop %v872
        %v874 = vmul.f32 %v869, %v873
        %v876 = vsel %vm787, %v874, 0
        %878 = vmatprep.subr.mxu0 0.0
        %879 = vmatpush1.msra.mxu0 0.0
        %880 = vmatprep.subr.mxu0 0.0
        %881 = vmatpush1.msra.mxu0 0.0
        %882 = vmatprep.subr.mxu0 0.0
        %883 = vmatpush1.msra.mxu0 0.0
        %884 = vmatprep.subr.mxu0 0.0
        %885 = vmatpush1.msra.mxu0 0.0
        %886 = vmatprep.subr.mxu0 0.0
        %887 = vmatpush1.msra.mxu0 0.0
        %888 = vmatprep.subr.mxu0 0.0
        %889 = vmatpush1.msra.mxu0 0.0
        %890 = vmatprep.subr.mxu0 0.0
        %891 = vmatpush1.msra.mxu0 0.0
        %892 = vmatprep.subr.mxu0 0.0
        %893 = vmatpush1.msra.mxu0 0.0
        %894 = vmatprep.subr.mxu0 0.0
        %895 = vmatpush1.msra.mxu0 0.0
        %896 = vmatprep.subr.mxu0 0.0
        %897 = vmatpush1.msra.mxu0 0.0
        %898 = vmatprep.subr.mxu0 0.0
        %899 = vmatpush1.msra.mxu0 0.0
        %900 = vmatprep.subr.mxu0 0.0
        %901 = vmatpush1.msra.mxu0 0.0
        %902 = vmatprep.subr.mxu0 0.0
        %903 = vmatpush1.msra.mxu0 0.0
        %904 = vmatprep.subr.mxu0 0.0
        %905 = vmatpush1.msra.mxu0 0.0
        %906 = vmatprep.subr.mxu0 0.0
        %907 = vmatpush1.msra.mxu0 0.0
        %908 = vmatprep.subr.mxu0 0.0
        %909 = vmatpush1.msra.mxu0 %v784
        %910 = vmatprep.subr.mxu0 0.0
        %911 = vmatpush2.msra.mxu0 0.0
        %912 = vmatprep.subr.mxu0 0.0
        %913 = vmatpush2.msra.mxu0 0.0
        %914 = vmatprep.subr.mxu0 0.0
        %915 = vmatpush2.msra.mxu0 0.0
        %916 = vmatprep.subr.mxu0 0.0
        %917 = vmatpush2.msra.mxu0 0.0
        %918 = vmatprep.subr.mxu0 0.0
        %919 = vmatpush2.msra.mxu0 0.0
        %920 = vmatprep.subr.mxu0 0.0
        %921 = vmatpush2.msra.mxu0 0.0
        %922 = vmatprep.subr.mxu0 0.0
        %923 = vmatpush2.msra.mxu0 0.0
        %924 = vmatprep.subr.mxu0 0.0
        %925 = vmatpush2.msra.mxu0 0.0
        %926 = vmatprep.subr.mxu0 0.0
        %927 = vmatpush2.msra.mxu0 0.0
        %928 = vmatprep.subr.mxu0 0.0
        %929 = vmatpush2.msra.mxu0 0.0
        %930 = vmatprep.subr.mxu0 0.0
        %931 = vmatpush2.msra.mxu0 0.0
        %932 = vmatprep.subr.mxu0 0.0
        %933 = vmatpush2.msra.mxu0 0.0
        %934 = vmatprep.subr.mxu0 0.0
        %935 = vmatpush2.msra.mxu0 0.0
        %936 = vmatprep.subr.mxu0 0.0
        %937 = vmatpush2.msra.mxu0 0.0
        %938 = vmatprep.subr.mxu0 0.0
        %939 = vmatpush2.msra.mxu0 0.0
        %940 = vmatprep.subr.mxu0 0.0
        %941 = vmatpush2.msra.mxu0 0.0
        %942 = vmatprep.mubr.f32.mxu0 0.0
        %943 = vmatmul.mubr.f32.gmra.mxu0 %v876
        %v944 = vpop.f32.mrf.mxu0
        %v945 = vadd.f32 0.0, %v944
        %v946 = vpop.f32.mrf.mxu0
        %947 = vdwg.mxu0
        %948 = vrot.lane.b32.xlu0 %v614, 120
        %v949 = vpop.permute.xlu0 %948
        %950 = vrot.lane.b32.xlu0 %v699, 120
        %v951 = vpop.permute.xlu0 %950
        %v952 = vsel %vm787, %v949, 0
        %v954 = vsel %vm787, %v951, 0
        %956 = vmatprep.subr.mxu0 0.0
        %957 = vmatpush1.xpose.msra.mxu0 0.0
        %958 = vmatprep.subr.mxu0 0.0
        %959 = vmatpush1.xpose.msra.mxu0 0.0
        %960 = vmatprep.subr.mxu0 0.0
        %961 = vmatpush1.xpose.msra.mxu0 0.0
        %962 = vmatprep.subr.mxu0 0.0
        %963 = vmatpush1.xpose.msra.mxu0 0.0
        %964 = vmatprep.subr.mxu0 0.0
        %965 = vmatpush1.xpose.msra.mxu0 0.0
        %966 = vmatprep.subr.mxu0 0.0
        %967 = vmatpush1.xpose.msra.mxu0 0.0
        %968 = vmatprep.subr.mxu0 0.0
        %969 = vmatpush1.xpose.msra.mxu0 0.0
        %970 = vmatprep.subr.mxu0 0.0
        %971 = vmatpush1.xpose.msra.mxu0 0.0
        %972 = vmatprep.subr.mxu0 0.0
        %973 = vmatpush1.xpose.msra.mxu0 0.0
        %974 = vmatprep.subr.mxu0 0.0
        %975 = vmatpush1.xpose.msra.mxu0 0.0
        %976 = vmatprep.subr.mxu0 0.0
        %977 = vmatpush1.xpose.msra.mxu0 0.0
        %978 = vmatprep.subr.mxu0 0.0
        %979 = vmatpush1.xpose.msra.mxu0 0.0
        %980 = vmatprep.subr.mxu0 0.0
        %981 = vmatpush1.xpose.msra.mxu0 0.0
        %982 = vmatprep.subr.mxu0 0.0
        %983 = vmatpush1.xpose.msra.mxu0 0.0
        %984 = vmatprep.subr.mxu0 0.0
        %985 = vmatpush1.xpose.msra.mxu0 0.0
        %986 = vmatprep.subr.mxu0 0.0
        %987 = vmatpush1.xpose.msra.mxu0 %v954
        %988 = vmatprep.subr.mxu0 0.0
        %989 = vmatpush2.xpose.msra.mxu0 0.0
        %990 = vmatprep.subr.mxu0 0.0
        %991 = vmatpush2.xpose.msra.mxu0 0.0
        %992 = vmatprep.subr.mxu0 0.0
        %993 = vmatpush2.xpose.msra.mxu0 0.0
        %994 = vmatprep.subr.mxu0 0.0
        %995 = vmatpush2.xpose.msra.mxu0 0.0
        %996 = vmatprep.subr.mxu0 0.0
        %997 = vmatpush2.xpose.msra.mxu0 0.0
        %998 = vmatprep.subr.mxu0 0.0
        %999 = vmatpush2.xpose.msra.mxu0 0.0
        %1000 = vmatprep.subr.mxu0 0.0
        %1001 = vmatpush2.xpose.msra.mxu0 0.0
        %1002 = vmatprep.subr.mxu0 0.0
        %1003 = vmatpush2.xpose.msra.mxu0 0.0
        %1004 = vmatprep.subr.mxu0 0.0
        %1005 = vmatpush2.xpose.msra.mxu0 0.0
        %1006 = vmatprep.subr.mxu0 0.0
        %1007 = vmatpush2.xpose.msra.mxu0 0.0
        %1008 = vmatprep.subr.mxu0 0.0
        %1009 = vmatpush2.xpose.msra.mxu0 0.0
        %1010 = vmatprep.subr.mxu0 0.0
        %1011 = vmatpush2.xpose.msra.mxu0 0.0
        %1012 = vmatprep.subr.mxu0 0.0
        %1013 = vmatpush2.xpose.msra.mxu0 0.0
        %1014 = vmatprep.subr.mxu0 0.0
        %1015 = vmatpush2.xpose.msra.mxu0 0.0
        %1016 = vmatprep.subr.mxu0 0.0
        %1017 = vmatpush2.xpose.msra.mxu0 0.0
        %1018 = vmatprep.subr.mxu0 0.0
        %1019 = vmatpush2.xpose.msra.mxu0 0.0
        %1020 = vmatprep.mubr.f32.mxu0 0.0
        %1021 = vmatmul.mubr.f32.gmra.mxu0 %v952
        %v1022 = vpop.f32.mrf.mxu0
        %v1023 = vadd.f32 0.0, %v1022
        %v1024 = vpop.f32.mrf.mxu0
        %1025 = vdwg.mxu0
        %v1026 = vsel %vm787, %v1023, -inf
        %1027 = vmax.xlane.f32.xlu0 %v1026
        %v1028 = vpop.xlane.xlu0 %1027
        %v1029 = vsub.f32 %v1023, %v1028
        %v1030 = vmul.f32 %v1029, 1.442695
        %v1031 = vpow.pop %v1030
        %v1032 = vsel %vm787, %v1031, 0.0
        %1033 = vadd.xlane.f32.xlu0 %v1032
        %v1034 = vpop.xlane.xlu0 %1033
        %v1035 = vrcp.pop %v1034
        %v1036 = vmul.f32 %v1031, %v1035
        %1038 = vrot.lane.b32.xlu0 %v784, 120
        %v1039 = vpop.permute.xlu0 %1038
        %v1042 = vsel %vm787, %v1036, 0
        %1044 = vmatprep.subr.mxu0 0.0
        %1045 = vmatpush1.msra.mxu0 0.0
        %1046 = vmatprep.subr.mxu0 0.0
        %1047 = vmatpush1.msra.mxu0 0.0
        %1048 = vmatprep.subr.mxu0 0.0
        %1049 = vmatpush1.msra.mxu0 0.0
        %1050 = vmatprep.subr.mxu0 0.0
        %1051 = vmatpush1.msra.mxu0 0.0
        %1052 = vmatprep.subr.mxu0 0.0
        %1053 = vmatpush1.msra.mxu0 0.0
        %1054 = vmatprep.subr.mxu0 0.0
        %1055 = vmatpush1.msra.mxu0 0.0
        %1056 = vmatprep.subr.mxu0 0.0
        %1057 = vmatpush1.msra.mxu0 0.0
        %1058 = vmatprep.subr.mxu0 0.0
        %1059 = vmatpush1.msra.mxu0 0.0
        %1060 = vmatprep.subr.mxu0 0.0
        %1061 = vmatpush1.msra.mxu0 0.0
        %1062 = vmatprep.subr.mxu0 0.0
        %1063 = vmatpush1.msra.mxu0 0.0
        %1064 = vmatprep.subr.mxu0 0.0
        %1065 = vmatpush1.msra.mxu0 0.0
        %1066 = vmatprep.subr.mxu0 0.0
        %1067 = vmatpush1.msra.mxu0 0.0
        %1068 = vmatprep.subr.mxu0 0.0
        %1069 = vmatpush1.msra.mxu0 0.0
        %1070 = vmatprep.subr.mxu0 0.0
        %1071 = vmatpush1.msra.mxu0 0.0
        %1072 = vmatprep.subr.mxu0 0.0
        %1073 = vmatpush1.msra.mxu0 0.0
        %1074 = vmatprep.subr.mxu0 0.0
        %1075 = vmatpush1.msra.mxu0 %v1039
        %1076 = vmatprep.subr.mxu0 0.0
        %1077 = vmatpush2.msra.mxu0 0.0
        %1078 = vmatprep.subr.mxu0 0.0
        %1079 = vmatpush2.msra.mxu0 0.0
        %1080 = vmatprep.subr.mxu0 0.0
        %1081 = vmatpush2.msra.mxu0 0.0
        %1082 = vmatprep.subr.mxu0 0.0
        %1083 = vmatpush2.msra.mxu0 0.0
        %1084 = vmatprep.subr.mxu0 0.0
        %1085 = vmatpush2.msra.mxu0 0.0
        %1086 = vmatprep.subr.mxu0 0.0
        %1087 = vmatpush2.msra.mxu0 0.0
        %1088 = vmatprep.subr.mxu0 0.0
        %1089 = vmatpush2.msra.mxu0 0.0
        %1090 = vmatprep.subr.mxu0 0.0
        %1091 = vmatpush2.msra.mxu0 0.0
        %1092 = vmatprep.subr.mxu0 0.0
        %1093 = vmatpush2.msra.mxu0 0.0
        %1094 = vmatprep.subr.mxu0 0.0
        %1095 = vmatpush2.msra.mxu0 0.0
        %1096 = vmatprep.subr.mxu0 0.0
        %1097 = vmatpush2.msra.mxu0 0.0
        %1098 = vmatprep.subr.mxu0 0.0
        %1099 = vmatpush2.msra.mxu0 0.0
        %1100 = vmatprep.subr.mxu0 0.0
        %1101 = vmatpush2.msra.mxu0 0.0
        %1102 = vmatprep.subr.mxu0 0.0
        %1103 = vmatpush2.msra.mxu0 0.0
        %1104 = vmatprep.subr.mxu0 0.0
        %1105 = vmatpush2.msra.mxu0 0.0
        %1106 = vmatprep.subr.mxu0 0.0
        %1107 = vmatpush2.msra.mxu0 0.0
        %1108 = vmatprep.mubr.f32.mxu0 0.0
        %1109 = vmatmul.mubr.f32.gmra.mxu0 %v1042
        %v1110 = vpop.f32.mrf.mxu0
        %v1111 = vadd.f32 0.0, %v1110
        %v1112 = vpop.f32.mrf.mxu0
        %1113 = vdwg.mxu0
        %1114 = vrot.lane.b32.xlu0 %v614, 112
        %v1115 = vpop.permute.xlu0 %1114
        %1116 = vrot.lane.b32.xlu0 %v699, 112
        %v1117 = vpop.permute.xlu0 %1116
        %v1118 = vsel %vm787, %v1115, 0
        %v1120 = vsel %vm787, %v1117, 0
        %1122 = vmatprep.subr.mxu0 0.0
        %1123 = vmatpush1.xpose.msra.mxu0 0.0
        %1124 = vmatprep.subr.mxu0 0.0
        %1125 = vmatpush1.xpose.msra.mxu0 0.0
        %1126 = vmatprep.subr.mxu0 0.0
        %1127 = vmatpush1.xpose.msra.mxu0 0.0
        %1128 = vmatprep.subr.mxu0 0.0
        %1129 = vmatpush1.xpose.msra.mxu0 0.0
        %1130 = vmatprep.subr.mxu0 0.0
        %1131 = vmatpush1.xpose.msra.mxu0 0.0
        %1132 = vmatprep.subr.mxu0 0.0
        %1133 = vmatpush1.xpose.msra.mxu0 0.0
        %1134 = vmatprep.subr.mxu0 0.0
        %1135 = vmatpush1.xpose.msra.mxu0 0.0
        %1136 = vmatprep.subr.mxu0 0.0
        %1137 = vmatpush1.xpose.msra.mxu0 0.0
        %1138 = vmatprep.subr.mxu0 0.0
        %1139 = vmatpush1.xpose.msra.mxu0 0.0
        %1140 = vmatprep.subr.mxu0 0.0
        %1141 = vmatpush1.xpose.msra.mxu0 0.0
        %1142 = vmatprep.subr.mxu0 0.0
        %1143 = vmatpush1.xpose.msra.mxu0 0.0
        %1144 = vmatprep.subr.mxu0 0.0
        %1145 = vmatpush1.xpose.msra.mxu0 0.0
        %1146 = vmatprep.subr.mxu0 0.0
        %1147 = vmatpush1.xpose.msra.mxu0 0.0
        %1148 = vmatprep.subr.mxu0 0.0
        %1149 = vmatpush1.xpose.msra.mxu0 0.0
        %1150 = vmatprep.subr.mxu0 0.0
        %1151 = vmatpush1.xpose.msra.mxu0 0.0
        %1152 = vmatprep.subr.mxu0 0.0
        %1153 = vmatpush1.xpose.msra.mxu0 %v1120
        %1154 = vmatprep.subr.mxu0 0.0
        %1155 = vmatpush2.xpose.msra.mxu0 0.0
        %1156 = vmatprep.subr.mxu0 0.0
        %1157 = vmatpush2.xpose.msra.mxu0 0.0
        %1158 = vmatprep.subr.mxu0 0.0
        %1159 = vmatpush2.xpose.msra.mxu0 0.0
        %1160 = vmatprep.subr.mxu0 0.0
        %1161 = vmatpush2.xpose.msra.mxu0 0.0
        %1162 = vmatprep.subr.mxu0 0.0
        %1163 = vmatpush2.xpose.msra.mxu0 0.0
        %1164 = vmatprep.subr.mxu0 0.0
        %1165 = vmatpush2.xpose.msra.mxu0 0.0
        %1166 = vmatprep.subr.mxu0 0.0
        %1167 = vmatpush2.xpose.msra.mxu0 0.0
        %1168 = vmatprep.subr.mxu0 0.0
        %1169 = vmatpush2.xpose.msra.mxu0 0.0
        %1170 = vmatprep.subr.mxu0 0.0
        %1171 = vmatpush2.xpose.msra.mxu0 0.0
        %1172 = vmatprep.subr.mxu0 0.0
        %1173 = vmatpush2.xpose.msra.mxu0 0.0
        %1174 = vmatprep.subr.mxu0 0.0
        %1175 = vmatpush2.xpose.msra.mxu0 0.0
        %1176 = vmatprep.subr.mxu0 0.0
        %1177 = vmatpush2.xpose.msra.mxu0 0.0
        %1178 = vmatprep.subr.mxu0 0.0
        %1179 = vmatpush2.xpose.msra.mxu0 0.0
        %1180 = vmatprep.subr.mxu0 0.0
        %1181 = vmatpush2.xpose.msra.mxu0 0.0
        %1182 = vmatprep.subr.mxu0 0.0
        %1183 = vmatpush2.xpose.msra.mxu0 0.0
        %1184 = vmatprep.subr.mxu0 0.0
        %1185 = vmatpush2.xpose.msra.mxu0 0.0
        %1186 = vmatprep.mubr.f32.mxu0 0.0
        %1187 = vmatmul.mubr.f32.gmra.mxu0 %v1118
        %v1188 = vpop.f32.mrf.mxu0
        %v1189 = vadd.f32 0.0, %v1188
        %v1190 = vpop.f32.mrf.mxu0
        %1191 = vdwg.mxu0
        %v1192 = vsel %vm787, %v1189, -inf
        %1193 = vmax.xlane.f32.xlu0 %v1192
        %v1194 = vpop.xlane.xlu0 %1193
        %v1195 = vsub.f32 %v1189, %v1194
        %v1196 = vmul.f32 %v1195, 1.442695
        %v1197 = vpow.pop %v1196
        %v1198 = vsel %vm787, %v1197, 0.0
        %1199 = vadd.xlane.f32.xlu0 %v1198
        %v1200 = vpop.xlane.xlu0 %1199
        %v1201 = vrcp.pop %v1200
        %v1202 = vmul.f32 %v1197, %v1201
        %1203 = vrot.lane.b32.xlu0 %v784, 112
        %v1204 = vpop.permute.xlu0 %1203
        %v1207 = vsel %vm787, %v1202, 0
        %1209 = vmatprep.subr.mxu0 0.0
        %1210 = vmatpush1.msra.mxu0 0.0
        %1211 = vmatprep.subr.mxu0 0.0
        %1212 = vmatpush1.msra.mxu0 0.0
        %1213 = vmatprep.subr.mxu0 0.0
        %1214 = vmatpush1.msra.mxu0 0.0
        %1215 = vmatprep.subr.mxu0 0.0
        %1216 = vmatpush1.msra.mxu0 0.0
        %1217 = vmatprep.subr.mxu0 0.0
        %1218 = vmatpush1.msra.mxu0 0.0
        %1219 = vmatprep.subr.mxu0 0.0
        %1220 = vmatpush1.msra.mxu0 0.0
        %1221 = vmatprep.subr.mxu0 0.0
        %1222 = vmatpush1.msra.mxu0 0.0
        %1223 = vmatprep.subr.mxu0 0.0
        %1224 = vmatpush1.msra.mxu0 0.0
        %1225 = vmatprep.subr.mxu0 0.0
        %1226 = vmatpush1.msra.mxu0 0.0
        %1227 = vmatprep.subr.mxu0 0.0
        %1228 = vmatpush1.msra.mxu0 0.0
        %1229 = vmatprep.subr.mxu0 0.0
        %1230 = vmatpush1.msra.mxu0 0.0
        %1231 = vmatprep.subr.mxu0 0.0
        %1232 = vmatpush1.msra.mxu0 0.0
        %1233 = vmatprep.subr.mxu0 0.0
        %1234 = vmatpush1.msra.mxu0 0.0
        %1235 = vmatprep.subr.mxu0 0.0
        %1236 = vmatpush1.msra.mxu0 0.0
        %1237 = vmatprep.subr.mxu0 0.0
        %1238 = vmatpush1.msra.mxu0 0.0
        %1239 = vmatprep.subr.mxu0 0.0
        %1240 = vmatpush1.msra.mxu0 %v1204
        %1241 = vmatprep.subr.mxu0 0.0
        %1242 = vmatpush2.msra.mxu0 0.0
        %1243 = vmatprep.subr.mxu0 0.0
        %1244 = vmatpush2.msra.mxu0 0.0
        %1245 = vmatprep.subr.mxu0 0.0
        %1246 = vmatpush2.msra.mxu0 0.0
        %1247 = vmatprep.subr.mxu0 0.0
        %1248 = vmatpush2.msra.mxu0 0.0
        %1249 = vmatprep.subr.mxu0 0.0
        %1250 = vmatpush2.msra.mxu0 0.0
        %1251 = vmatprep.subr.mxu0 0.0
        %1252 = vmatpush2.msra.mxu0 0.0
        %1253 = vmatprep.subr.mxu0 0.0
        %1254 = vmatpush2.msra.mxu0 0.0
        %1255 = vmatprep.subr.mxu0 0.0
        %1256 = vmatpush2.msra.mxu0 0.0
        %1257 = vmatprep.subr.mxu0 0.0
        %1258 = vmatpush2.msra.mxu0 0.0
        %1259 = vmatprep.subr.mxu0 0.0
        %1260 = vmatpush2.msra.mxu0 0.0
        %1261 = vmatprep.subr.mxu0 0.0
        %1262 = vmatpush2.msra.mxu0 0.0
        %1263 = vmatprep.subr.mxu0 0.0
        %1264 = vmatpush2.msra.mxu0 0.0
        %1265 = vmatprep.subr.mxu0 0.0
        %1266 = vmatpush2.msra.mxu0 0.0
        %1267 = vmatprep.subr.mxu0 0.0
        %1268 = vmatpush2.msra.mxu0 0.0
        %1269 = vmatprep.subr.mxu0 0.0
        %1270 = vmatpush2.msra.mxu0 0.0
        %1271 = vmatprep.subr.mxu0 0.0
        %1272 = vmatpush2.msra.mxu0 0.0
        %1273 = vmatprep.mubr.f32.mxu0 0.0
        %1274 = vmatmul.mubr.f32.gmra.mxu0 %v1207
        %v1275 = vpop.f32.mrf.mxu0
        %v1276 = vadd.f32 0.0, %v1275
        %v1277 = vpop.f32.mrf.mxu0
        %1278 = vdwg.mxu0
        %1279 = vrot.lane.b32.xlu0 %v614, 104
        %v1280 = vpop.permute.xlu0 %1279
        %1281 = vrot.lane.b32.xlu0 %v699, 104
        %v1282 = vpop.permute.xlu0 %1281
        %v1283 = vsel %vm787, %v1280, 0
        %v1285 = vsel %vm787, %v1282, 0
        %1287 = vmatprep.subr.mxu0 0.0
        %1288 = vmatpush1.xpose.msra.mxu0 0.0
        %1289 = vmatprep.subr.mxu0 0.0
        %1290 = vmatpush1.xpose.msra.mxu0 0.0
        %1291 = vmatprep.subr.mxu0 0.0
        %1292 = vmatpush1.xpose.msra.mxu0 0.0
        %1293 = vmatprep.subr.mxu0 0.0
        %1294 = vmatpush1.xpose.msra.mxu0 0.0
        %1295 = vmatprep.subr.mxu0 0.0
        %1296 = vmatpush1.xpose.msra.mxu0 0.0
        %1297 = vmatprep.subr.mxu0 0.0
        %1298 = vmatpush1.xpose.msra.mxu0 0.0
        %1299 = vmatprep.subr.mxu0 0.0
        %1300 = vmatpush1.xpose.msra.mxu0 0.0
        %1301 = vmatprep.subr.mxu0 0.0
        %1302 = vmatpush1.xpose.msra.mxu0 0.0
        %1303 = vmatprep.subr.mxu0 0.0
        %1304 = vmatpush1.xpose.msra.mxu0 0.0
        %1305 = vmatprep.subr.mxu0 0.0
        %1306 = vmatpush1.xpose.msra.mxu0 0.0
        %1307 = vmatprep.subr.mxu0 0.0
        %1308 = vmatpush1.xpose.msra.mxu0 0.0
        %1309 = vmatprep.subr.mxu0 0.0
        %1310 = vmatpush1.xpose.msra.mxu0 0.0
        %1311 = vmatprep.subr.mxu0 0.0
        %1312 = vmatpush1.xpose.msra.mxu0 0.0
        %1313 = vmatprep.subr.mxu0 0.0
        %1314 = vmatpush1.xpose.msra.mxu0 0.0
        %1315 = vmatprep.subr.mxu0 0.0
        %1316 = vmatpush1.xpose.msra.mxu0 0.0
        %1317 = vmatprep.subr.mxu0 0.0
        %1318 = vmatpush1.xpose.msra.mxu0 %v1285
        %1319 = vmatprep.subr.mxu0 0.0
        %1320 = vmatpush2.xpose.msra.mxu0 0.0
        %1321 = vmatprep.subr.mxu0 0.0
        %1322 = vmatpush2.xpose.msra.mxu0 0.0
        %1323 = vmatprep.subr.mxu0 0.0
        %1324 = vmatpush2.xpose.msra.mxu0 0.0
        %1325 = vmatprep.subr.mxu0 0.0
        %1326 = vmatpush2.xpose.msra.mxu0 0.0
        %1327 = vmatprep.subr.mxu0 0.0
        %1328 = vmatpush2.xpose.msra.mxu0 0.0
        %1329 = vmatprep.subr.mxu0 0.0
        %1330 = vmatpush2.xpose.msra.mxu0 0.0
        %1331 = vmatprep.subr.mxu0 0.0
        %1332 = vmatpush2.xpose.msra.mxu0 0.0
        %1333 = vmatprep.subr.mxu0 0.0
        %1334 = vmatpush2.xpose.msra.mxu0 0.0
        %1335 = vmatprep.subr.mxu0 0.0
        %1336 = vmatpush2.xpose.msra.mxu0 0.0
        %1337 = vmatprep.subr.mxu0 0.0
        %1338 = vmatpush2.xpose.msra.mxu0 0.0
        %1339 = vmatprep.subr.mxu0 0.0
        %1340 = vmatpush2.xpose.msra.mxu0 0.0
        %1341 = vmatprep.subr.mxu0 0.0
        %1342 = vmatpush2.xpose.msra.mxu0 0.0
        %1343 = vmatprep.subr.mxu0 0.0
        %1344 = vmatpush2.xpose.msra.mxu0 0.0
        %1345 = vmatprep.subr.mxu0 0.0
        %1346 = vmatpush2.xpose.msra.mxu0 0.0
        %1347 = vmatprep.subr.mxu0 0.0
        %1348 = vmatpush2.xpose.msra.mxu0 0.0
        %1349 = vmatprep.subr.mxu0 0.0
        %1350 = vmatpush2.xpose.msra.mxu0 0.0
        %1351 = vmatprep.mubr.f32.mxu0 0.0
        %1352 = vmatmul.mubr.f32.gmra.mxu0 %v1283
        %v1353 = vpop.f32.mrf.mxu0
        %v1354 = vadd.f32 0.0, %v1353
        %v1355 = vpop.f32.mrf.mxu0
        %1356 = vdwg.mxu0
        %v1357 = vsel %vm787, %v1354, -inf
        %1358 = vmax.xlane.f32.xlu0 %v1357
        %v1359 = vpop.xlane.xlu0 %1358
        %v1360 = vsub.f32 %v1354, %v1359
        %v1361 = vmul.f32 %v1360, 1.442695
        %v1362 = vpow.pop %v1361
        %v1363 = vsel %vm787, %v1362, 0.0
        %1364 = vadd.xlane.f32.xlu0 %v1363
        %v1365 = vpop.xlane.xlu0 %1364
        %v1366 = vrcp.pop %v1365
        %v1367 = vmul.f32 %v1362, %v1366
        %1368 = vrot.lane.b32.xlu0 %v784, 104
        %v1369 = vpop.permute.xlu0 %1368
        %v1372 = vsel %vm787, %v1367, 0
        %1374 = vmatprep.subr.mxu0 0.0
        %1375 = vmatpush1.msra.mxu0 0.0
        %1376 = vmatprep.subr.mxu0 0.0
        %1377 = vmatpush1.msra.mxu0 0.0
        %1378 = vmatprep.subr.mxu0 0.0
        %1379 = vmatpush1.msra.mxu0 0.0
        %1380 = vmatprep.subr.mxu0 0.0
        %1381 = vmatpush1.msra.mxu0 0.0
        %1382 = vmatprep.subr.mxu0 0.0
        %1383 = vmatpush1.msra.mxu0 0.0
        %1384 = vmatprep.subr.mxu0 0.0
        %1385 = vmatpush1.msra.mxu0 0.0
        %1386 = vmatprep.subr.mxu0 0.0
        %1387 = vmatpush1.msra.mxu0 0.0
        %1388 = vmatprep.subr.mxu0 0.0
        %1389 = vmatpush1.msra.mxu0 0.0
        %1390 = vmatprep.subr.mxu0 0.0
        %1391 = vmatpush1.msra.mxu0 0.0
        %1392 = vmatprep.subr.mxu0 0.0
        %1393 = vmatpush1.msra.mxu0 0.0
        %1394 = vmatprep.subr.mxu0 0.0
        %1395 = vmatpush1.msra.mxu0 0.0
        %1396 = vmatprep.subr.mxu0 0.0
        %1397 = vmatpush1.msra.mxu0 0.0
        %1398 = vmatprep.subr.mxu0 0.0
        %1399 = vmatpush1.msra.mxu0 0.0
        %1400 = vmatprep.subr.mxu0 0.0
        %1401 = vmatpush1.msra.mxu0 0.0
        %1402 = vmatprep.subr.mxu0 0.0
        %1403 = vmatpush1.msra.mxu0 0.0
        %1404 = vmatprep.subr.mxu0 0.0
        %1405 = vmatpush1.msra.mxu0 %v1369
        %1406 = vmatprep.subr.mxu0 0.0
        %1407 = vmatpush2.msra.mxu0 0.0
        %1408 = vmatprep.subr.mxu0 0.0
        %1409 = vmatpush2.msra.mxu0 0.0
        %1410 = vmatprep.subr.mxu0 0.0
        %1411 = vmatpush2.msra.mxu0 0.0
        %1412 = vmatprep.subr.mxu0 0.0
        %1413 = vmatpush2.msra.mxu0 0.0
        %1414 = vmatprep.subr.mxu0 0.0
        %1415 = vmatpush2.msra.mxu0 0.0
        %1416 = vmatprep.subr.mxu0 0.0
        %1417 = vmatpush2.msra.mxu0 0.0
        %1418 = vmatprep.subr.mxu0 0.0
        %1419 = vmatpush2.msra.mxu0 0.0
        %1420 = vmatprep.subr.mxu0 0.0
        %1421 = vmatpush2.msra.mxu0 0.0
        %1422 = vmatprep.subr.mxu0 0.0
        %1423 = vmatpush2.msra.mxu0 0.0
        %1424 = vmatprep.subr.mxu0 0.0
        %1425 = vmatpush2.msra.mxu0 0.0
        %1426 = vmatprep.subr.mxu0 0.0
        %1427 = vmatpush2.msra.mxu0 0.0
        %1428 = vmatprep.subr.mxu0 0.0
        %1429 = vmatpush2.msra.mxu0 0.0
        %1430 = vmatprep.subr.mxu0 0.0
        %1431 = vmatpush2.msra.mxu0 0.0
        %1432 = vmatprep.subr.mxu0 0.0
        %1433 = vmatpush2.msra.mxu0 0.0
        %1434 = vmatprep.subr.mxu0 0.0
        %1435 = vmatpush2.msra.mxu0 0.0
        %1436 = vmatprep.subr.mxu0 0.0
        %1437 = vmatpush2.msra.mxu0 0.0
        %1438 = vmatprep.mubr.f32.mxu0 0.0
        %1439 = vmatmul.mubr.f32.gmra.mxu0 %v1372
        %v1440 = vpop.f32.mrf.mxu0
        %v1441 = vadd.f32 0.0, %v1440
        %v1442 = vpop.f32.mrf.mxu0
        %1443 = vdwg.mxu0
        %1445 = vrot.lane.b32.xlu0 %v1111, 8
        %v1446 = vpop.permute.xlu0 %1445
        %1449 = vrot.lane.b32.xlu0 %v1276, 16
        %v1450 = vpop.permute.xlu0 %1449
        %1453 = vrot.lane.b32.xlu0 %v1441, 24
        %v1454 = vpop.permute.xlu0 %1453
        %v1456 = vsel %vm787, %v945, %v1446
        %vm1457 = vcmask 130048
        %v1458 = vsel %vm1457, %v1456, %v1450
        %vm1459 = vcmask 195584
        %v1460 = vsel %vm1459, %v1458, %v1454
        %v1461 = vld [vmem:[#allocation13] sm:$0xff]
        %v1462 = vld [vmem:[#allocation13 + $0x8] sm:$0xff]
        %v1463 = vld [vmem:[#allocation13 + $0x10] sm:$0xff]
        %v1464 = vld [vmem:[#allocation13 + $0x18] sm:$0xff]
        %v1465 = vld [vmem:[%s10] sm:$0x1]
        %v1467 = vlaneseq
        %v1468 = vshrl.u32 %v1467, 7
        %v1469 = vsub.s32 0, %v1468
        %v1470 = vrot.slane %v1465, %v1469
        %v1473 = vsel %vm543, %v1460, 0
        %1475 = vmatprep.subr.mxu0 0.0
        %1476 = vmatpush1.msra.mxu0 0.0
        %1477 = vmatprep.subr.mxu0 0.0
        %1478 = vmatpush1.msra.mxu0 0.0
        %1479 = vmatprep.subr.mxu0 0.0
        %1480 = vmatpush1.msra.mxu0 0.0
        %1481 = vmatprep.subr.mxu0 0.0
        %1482 = vmatpush1.msra.mxu0 0.0
        %1483 = vmatprep.subr.mxu0 0.0
        %1484 = vmatpush1.msra.mxu0 0.0
        %1485 = vmatprep.subr.mxu0 0.0
        %1486 = vmatpush1.msra.mxu0 0.0
        %1487 = vmatprep.subr.mxu0 0.0
        %1488 = vmatpush1.msra.mxu0 0.0
        %1489 = vmatprep.subr.mxu0 0.0
        %1490 = vmatpush1.msra.mxu0 0.0
        %1491 = vmatprep.subr.mxu0 0.0
        %1492 = vmatpush1.msra.mxu0 0.0
        %1493 = vmatprep.subr.mxu0 0.0
        %1494 = vmatpush1.msra.mxu0 0.0
        %1495 = vmatprep.subr.mxu0 0.0
        %1496 = vmatpush1.msra.mxu0 0.0
        %1497 = vmatprep.subr.mxu0 0.0
        %1498 = vmatpush1.msra.mxu0 0.0
        %1499 = vmatprep.subr.mxu0 0.0
        %1500 = vmatpush1.msra.mxu0 %v1464
        %1501 = vmatprep.subr.mxu0 0.0
        %1502 = vmatpush1.msra.mxu0 %v1463
        %1503 = vmatprep.subr.mxu0 0.0
        %1504 = vmatpush1.msra.mxu0 %v1462
        %1505 = vmatprep.subr.mxu0 0.0
        %1506 = vmatpush1.msra.mxu0 %v1461
        %1507 = vmatprep.subr.mxu0 0.0
        %1508 = vmatpush2.msra.mxu0 0.0
        %1509 = vmatprep.subr.mxu0 0.0
        %1510 = vmatpush2.msra.mxu0 0.0
        %1511 = vmatprep.subr.mxu0 0.0
        %1512 = vmatpush2.msra.mxu0 0.0
        %1513 = vmatprep.subr.mxu0 0.0
        %1514 = vmatpush2.msra.mxu0 0.0
        %1515 = vmatprep.subr.mxu0 0.0
        %1516 = vmatpush2.msra.mxu0 0.0
        %1517 = vmatprep.subr.mxu0 0.0
        %1518 = vmatpush2.msra.mxu0 0.0
        %1519 = vmatprep.subr.mxu0 0.0
        %1520 = vmatpush2.msra.mxu0 0.0
        %1521 = vmatprep.subr.mxu0 0.0
        %1522 = vmatpush2.msra.mxu0 0.0
        %1523 = vmatprep.subr.mxu0 0.0
        %1524 = vmatpush2.msra.mxu0 0.0
        %1525 = vmatprep.subr.mxu0 0.0
        %1526 = vmatpush2.msra.mxu0 0.0
        %1527 = vmatprep.subr.mxu0 0.0
        %1528 = vmatpush2.msra.mxu0 0.0
        %1529 = vmatprep.subr.mxu0 0.0
        %1530 = vmatpush2.msra.mxu0 0.0
        %1531 = vmatprep.subr.mxu0 0.0
        %1532 = vmatpush2.msra.mxu0 0.0
        %1533 = vmatprep.subr.mxu0 0.0
        %1534 = vmatpush2.msra.mxu0 0.0
        %1535 = vmatprep.subr.mxu0 0.0
        %1536 = vmatpush2.msra.mxu0 0.0
        %1537 = vmatprep.subr.mxu0 0.0
        %1538 = vmatpush2.msra.mxu0 0.0
        %1539 = vmatprep.mubr.f32.mxu0 0.0
        %1540 = vmatmul.mubr.f32.gmra.mxu0 %v1473
        %v1541 = vpop.f32.mrf.mxu0
        %v1542 = vadd.f32 %v1470, %v1541
        %v1543 = vpop.f32.mrf.mxu0
        %1544 = vdwg.mxu0
        %1545 = vst.msk [vmem:[%s530] sm:$0xff] %vm543, %v1542
        %s1546 = sand.u32 %s287, 1
        %s1547 = scalar_lea.sflag [#allocation4], %s1546
        %s1548 = sand.u32 %s287, 1
        %s1549 = smul.addr %s1548, 8
        %s1550 = scalar_lea.vmem [#allocation14], %s1549
        // Predicated region
        $region93: #{tpu_custom_call.1} parent=63 // pred_check
          %p1551 = pneg %p297
        $region94: #{tpu_custom_call.1} parent=63 // pred_check_branch
          %1553 = sbr.rel (%p1551) target = $region96
        $region95: #{tpu_custom_call.1} parent=63 // pred_region
          %s1555 = ssub.s32 128, 128
          %1556 = vsyncadd %s1547, %s1555
          %s1557 = smul.addr %s33, 128
          %s1558 = scalar_lea.hbm %s11, %s1557
          %s1560 = sshll.u32 %s1550, 4
          %s1561 = int_to_ptr.vmem [resolvable:$true] %s1560
          %1563 = dma.vmem_to_hbm [thread:$0]  %s1561, 128, %s1558, %s1547
        $region96: #{tpu_custom_call.1} parent=63 // pred_fallthru
          _
      $region64: #{tpu_custom_call.1} parent=5 // pred_fallthru
        _
      %p1564 = scmp.le.s32.totalorder 2, %s28
      // Predicated region
      $region97: #{tpu_custom_call.1} parent=5 // pred_check
        %p1565 = pneg %p1564
      $region98: #{tpu_custom_call.1} parent=5 // pred_check_branch
        %1567 = sbr.rel (%p1565) target = $region100
      $region99: #{tpu_custom_call.1} parent=5 // pred_region
        %s1568 = ssub.s32 %s28, 2
        // Predicated region
        $region101: #{tpu_custom_call.1} parent=99 // pred_check
          %p1569 = pneg %p303
        $region102: #{tpu_custom_call.1} parent=99 // pred_check_branch
          %1571 = sbr.rel (%p1569) target = $region104
        $region103: #{tpu_custom_call.1} parent=99 // pred_region
          %s1572 = sand.u32 %s288, 1
          %s1573 = scalar_lea.sflag [#allocation4], %s1572
          %s1574 = sand.u32 %s288, 1
          %s1575 = smul.addr %s1574, 8
          %s1576 = scalar_lea.vmem [#allocation14], %s1575
          %1577 = dma.done %s1573, 128
        $region104: #{tpu_custom_call.1} parent=99 // pred_fallthru
          _
      $region100: #{tpu_custom_call.1} parent=5 // pred_fallthru
        _
    $region6: #{tpu_custom_call.1} parent=1 // loop_footer
      %s32 = sadd.s32 1, %s28
    $region7: #{tpu_custom_call.1} parent=1 // loop_footer_branch
      %27 = sbr.rel target = $region3
    $region8: #{tpu_custom_call.1} parent=1 // loop_exit
      _
    %1578 = vsyncpa [#allocation3], 1
    %s1579 = scalar_lea.sflag [#allocation3], 1
    %1580 = vsyncpa %s1579, 1
    %1581 = vsyncpa [#allocation6], 1
    %s1582 = scalar_lea.sflag [#allocation6], 1
    %1583 = vsyncpa %s1582, 1
    %1584 = vsyncpa [#allocation9], 1
    %1585 = vsyncpa [#allocation12], 1
    %1586 = vsyncpa [#allocation4], 1
    %s1587 = scalar_lea.sflag [#allocation4], 1
    %1588 = vsyncpa %s1587, 1

</llo_original>
